<compile_context>
chip_gen: v7x
topology: tpu7x:2x2x1
jax: 0.10.0
libtpu: 0.0.40
codegen_flags: <defaults>
</compile_context>

<pallas_src>
import functools

import jax
import jax.numpy as jnp
from jax.experimental import pallas as pl
from jax.experimental.pallas import tpu as pltpu


def _fused_kernel(x_ref, dw_ref, pw_ref, shift_ref, o_ref, xp_ref, *,
                  k, stride, padding, h, w, h_out, w_out, c_in, c_out):
    """One batch element per grid step (grid axis is 'parallel').

    x_ref:     (1, Cin, H*W)        flattened NCHW input row (lane-dense load)
    dw_ref:    (k, k, Cin)          depthwise weights, channels minor
    pw_ref:    (Cout, Cin)          pointwise weights with BN scale folded in
    shift_ref: (Cout, 1)            folded BN shift
    o_ref:     (1, Cout, Hout*Wout) lane-dense output block (NCHW-flattened)
    xp_ref:    (Hp, Wp, Cin)        VMEM scratch for the zero-padded tile
    """
    # (Cin, H*W) -> (H*W, Cin) -> (H, W, Cin).  One small in-VMEM transpose;
    # the reshape keeps the minor (channel) dim and is effectively free.
    x_hwc = x_ref[0].astype(jnp.float32).T.reshape(h, w, c_in)

    if padding > 0:
        hp, wp = h + 2 * padding, w + 2 * padding
        xp_ref[...] = jnp.zeros((hp, wp, c_in), jnp.float32)
        xp_ref[padding:padding + h, padding:padding + w, :] = x_hwc
        xp = xp_ref[...]
    else:
        xp = x_hwc

    dw = dw_ref[...].astype(jnp.float32)                     # (k, k, Cin)

    # Depthwise conv: k*k shifted (strided) windows * per-channel weights (VPU,
    # f32 accumulation -- keep f32 on the elementwise path for v5e as well).
    acc = jnp.zeros((h_out, w_out, c_in), jnp.float32)
    for kh in range(k):
        for kw in range(k):
            patch = xp[kh:kh + stride * h_out:stride,
                       kw:kw + stride * w_out:stride, :]
            acc = acc + patch * dw[kh, kw, :]

    # ReLU
    acc = jnp.maximum(acc, 0.0)

    # Pointwise 1x1 conv on the MXU.  NT matmul (contract the Cin minor dim of
    # both operands) so the result comes out directly as the lane-dense
    # (Cout, Hout*Wout) layout that the output block expects -- no transposed
    # store, no narrow masked stores.
    acc2 = acc.reshape(h_out * w_out, c_in)                  # minor dim unchanged
    y = jnp.dot(pw_ref[...], acc2.T, preferred_element_type=jnp.float32)
    y = y + shift_ref[...]                                   # (Cout, 1) lane-broadcast
    o_ref[0] = y.astype(o_ref.dtype)


def depthwise_conv_layer(x_nchw, dw_weight, pw_weight,
                         bn_gamma, bn_beta, bn_mean, bn_var,
                         *, stride=1, padding=0, eps=1e-5):
    """Forward pass of DepthwiseConvLayer.

    x_nchw:    (N, Cin, H, W)            -- PyTorch layout (kept end-to-end)
    dw_weight: (Cin, 1, k, k)            -- nn.Conv2d(groups=Cin) weight
    pw_weight: (Cout, Cin, 1, 1)         -- nn.Conv2d(Cin, Cout, 1) weight
    bn_*:      (Cout,)                   -- BatchNorm2d params / running stats
    returns    (N, Cout, Hout, Wout)
    """
    n, c_in, h, w = x_nchw.shape
    c_out = pw_weight.shape[0]
    k = dw_weight.shape[-1]
    h_out = (h + 2 * padding - k) // stride + 1
    w_out = (w + 2 * padding - k) // stride + 1
    hp, wp = h + 2 * padding, w + 2 * padding

    # --- wrapper glue: free reshapes + tiny weight-only preprocessing only ---
    x_flat = x_nchw.reshape(n, c_in, h * w)                  # contiguous merge: no HBM pass

    dw = jnp.transpose(dw_weight[:, 0, :, :], (1, 2, 0))     # (k, k, Cin)
    inv_std = 1.0 / jnp.sqrt(bn_var + eps)
    scale = bn_gamma * inv_std                               # (Cout,)
    pw = pw_weight[:, :, 0, 0] * scale[:, None]              # (Cout, Cin), BN scale folded
    shift = (bn_beta - bn_mean * scale).reshape(c_out, 1)    # (Cout, 1)

    kernel = functools.partial(_fused_kernel, k=k, stride=stride,
                               padding=padding, h=h, w=w,
                               h_out=h_out, w_out=w_out,
                               c_in=c_in, c_out=c_out)

    out_flat = pl.pallas_call(
        kernel,
        out_shape=jax.ShapeDtypeStruct((n, c_out, h_out * w_out), x_nchw.dtype),
        grid_spec=pltpu.PrefetchScalarGridSpec(
            num_scalar_prefetch=0,
            grid=(n,),                                       # >=2 steps keeps both v7x TCs busy
            in_specs=[
                pl.BlockSpec((1, c_in, h * w), lambda b: (b, 0, 0)),
                pl.BlockSpec((k, k, c_in), lambda b: (0, 0, 0)),
                pl.BlockSpec((c_out, c_in), lambda b: (0, 0)),
                pl.BlockSpec((c_out, 1), lambda b: (0, 0)),
            ],
            out_specs=pl.BlockSpec((1, c_out, h_out * w_out),
                                   lambda b: (b, 0, 0)),
            scratch_shapes=[pltpu.VMEM((hp, wp, c_in), jnp.float32)],
        ),
        compiler_params=pltpu.CompilerParams(
            dimension_semantics=("parallel",)),
    )(x_flat, dw, pw, shift)

    return out_flat.reshape(n, c_out, h_out, w_out)          # free trailing split -> NCHW


def _reference(x, dw_weight, pw_weight, gamma, beta, mean, var,
               *, stride, padding, eps=1e-5):
    c_in = x.shape[1]
    y = jax.lax.conv_general_dilated(
        x, dw_weight, window_strides=(stride, stride),
        padding=[(padding, padding), (padding, padding)],
        dimension_numbers=("NCHW", "OIHW", "NCHW"),
        feature_group_count=c_in)
    y = jnp.maximum(y, 0.0)
    y = jax.lax.conv_general_dilated(
        y, pw_weight, window_strides=(1, 1), padding="VALID",
        dimension_numbers=("NCHW", "OIHW", "NCHW"))
    inv_std = 1.0 / jnp.sqrt(var + eps)
    y = (y - mean[None, :, None, None]) * (gamma * inv_std)[None, :, None, None] \
        + beta[None, :, None, None]
    return y


if __name__ == "__main__":
    # Small shapes consistent with the module.
    N, C_IN, H, W = 2, 8, 16, 16
    C_OUT, K, STRIDE, PAD = 16, 3, 1, 1

    key = jax.random.PRNGKey(0)
    k1, k2, k3, k4, k5, k6 = jax.random.split(key, 6)

    x = jax.random.normal(k1, (N, C_IN, H, W), jnp.float32)
    dw_weight = jax.random.normal(k2, (C_IN, 1, K, K), jnp.float32) * 0.2
    pw_weight = jax.random.normal(k3, (C_OUT, C_IN, 1, 1), jnp.float32) * 0.2
    bn_gamma = 1.0 + 0.1 * jax.random.normal(k4, (C_OUT,), jnp.float32)
    bn_beta = 0.1 * jax.random.normal(k5, (C_OUT,), jnp.float32)
    bn_mean = 0.05 * jax.random.normal(k6, (C_OUT,), jnp.float32)
    bn_var = jnp.ones((C_OUT,), jnp.float32)

    out = depthwise_conv_layer(x, dw_weight, pw_weight,
                               bn_gamma, bn_beta, bn_mean, bn_var,
                               stride=STRIDE, padding=PAD)
    out = jax.block_until_ready(out)

    ref = _reference(x, dw_weight, pw_weight, bn_gamma, bn_beta, bn_mean,
                     bn_var, stride=STRIDE, padding=PAD)

    assert out.shape == (N, C_OUT, H, W), out.shape
    assert jnp.allclose(out, ref, atol=1e-4, rtol=1e-4), \
        float(jnp.max(jnp.abs(out - ref)))

    print("KERNEL_OK")
</pallas_src>

<mosaic_0001>
module attributes {stable_mosaic.version = 11 : i64} {
  func.func @_fused_kernel(%arg0: i32, %arg1: memref<1x8x256xf32, #tpu.memory_space<vmem>>, %arg2: memref<3x3x8xf32, #tpu.memory_space<vmem>>, %arg3: memref<16x8xf32, #tpu.memory_space<vmem>>, %arg4: memref<16x1xf32, #tpu.memory_space<vmem>>, %arg5: memref<1x16x256xf32, #tpu.memory_space<vmem>>, %arg6: memref<18x18x8xf32, #tpu.memory_space<vmem>>) attributes {dimension_semantics = [#tpu.dimension_semantics<parallel>], iteration_bounds = array<i64: 2>, scalar_prefetch = 0 : i64, scratch_operands = 1 : i64, tpu.core_type = #tpu.core_type<tc>, window_params = [{transform_indices = @transform_0, window_bounds = array<i64: 1, 8, 256>}, {pipeline_mode = #tpu.pipeline_mode<synchronous>, transform_indices = @transform_1, window_bounds = array<i64: 3, 3, 8>}, {pipeline_mode = #tpu.pipeline_mode<synchronous>, transform_indices = @transform_2, window_bounds = array<i64: 16, 8>}, {pipeline_mode = #tpu.pipeline_mode<synchronous>, transform_indices = @transform_3, window_bounds = array<i64: 16, 1>}, {transform_indices = @transform_4, window_bounds = array<i64: 1, 16, 256>}]} {
    %c0 = arith.constant 0 : index
    %c0_0 = arith.constant 0 : index
    %c0_1 = arith.constant 0 : index
    %0 = vector.load %arg1[%c0, %c0_0, %c0_1] : memref<1x8x256xf32, #tpu.memory_space<vmem>>, vector<1x8x256xf32>
    %1 = vector.shape_cast %0 : vector<1x8x256xf32> to vector<8x256xf32>
    %2 = tpu.transpose %1, [1, 0] : vector<8x256xf32> -> vector<256x8xf32>
    %3 = vector.shape_cast %2 : vector<256x8xf32> to vector<16x16x8xf32>
    %cst = arith.constant 0.000000e+00 : f32
    %4 = vector.broadcast %cst : f32 to vector<18x18x8xf32>
    %c0_2 = arith.constant 0 : index
    %c0_3 = arith.constant 0 : index
    %c0_4 = arith.constant 0 : index
    %5 = vector.load %arg6[%c0_2, %c0_3, %c0_4] : memref<18x18x8xf32, #tpu.memory_space<vmem>>, vector<18x18x8xf32>
    tpu.vector_store %arg6[%c0_2, %c0_3, %c0_4], %4 {strides = array<i32>} : memref<18x18x8xf32, #tpu.memory_space<vmem>>, vector<18x18x8xf32>,
    %c1 = arith.constant 1 : index
    %c1_5 = arith.constant 1 : index
    %c0_6 = arith.constant 0 : index
    %6 = vector.load %arg6[%c1, %c1_5, %c0_6] : memref<18x18x8xf32, #tpu.memory_space<vmem>>, vector<16x16x8xf32>
    tpu.vector_store %arg6[%c1, %c1_5, %c0_6], %3 {strides = array<i32>} : memref<18x18x8xf32, #tpu.memory_space<vmem>>, vector<16x16x8xf32>,
    %c0_7 = arith.constant 0 : index
    %c0_8 = arith.constant 0 : index
    %c0_9 = arith.constant 0 : index
    %7 = vector.load %arg6[%c0_7, %c0_8, %c0_9] : memref<18x18x8xf32, #tpu.memory_space<vmem>>, vector<18x18x8xf32>
    %c0_10 = arith.constant 0 : index
    %c0_11 = arith.constant 0 : index
    %c0_12 = arith.constant 0 : index
    %8 = vector.load %arg2[%c0_10, %c0_11, %c0_12] : memref<3x3x8xf32, #tpu.memory_space<vmem>>, vector<3x3x8xf32>
    %cst_13 = arith.constant 0.000000e+00 : f32
    %9 = vector.broadcast %cst_13 : f32 to vector<16x16x8xf32>
    %10 = vector.extract_strided_slice %7 {offsets = [0, 0, 0], sizes = [16, 16, 8], strides = [1, 1, 1]} : vector<18x18x8xf32> to vector<16x16x8xf32>
    %11 = vector.extract_strided_slice %8 {offsets = [0, 0, 0], sizes = [1, 1, 8], strides = [1, 1, 1]} : vector<3x3x8xf32> to vector<1x1x8xf32>
    %12 = vector.shape_cast %11 : vector<1x1x8xf32> to vector<8xf32>
    %13 = vector.shape_cast %12 : vector<8xf32> to vector<1x1x8xf32>
    %14 = vector.broadcast %13 : vector<1x1x8xf32> to vector<16x16x8xf32>
    %15 = arith.mulf %10, %14 : vector<16x16x8xf32>
    %16 = arith.addf %9, %15 : vector<16x16x8xf32>
    %17 = vector.extract_strided_slice %7 {offsets = [0, 1, 0], sizes = [16, 16, 8], strides = [1, 1, 1]} : vector<18x18x8xf32> to vector<16x16x8xf32>
    %18 = vector.extract_strided_slice %8 {offsets = [0, 1, 0], sizes = [1, 1, 8], strides = [1, 1, 1]} : vector<3x3x8xf32> to vector<1x1x8xf32>
    %19 = vector.shape_cast %18 : vector<1x1x8xf32> to vector<8xf32>
    %20 = vector.shape_cast %19 : vector<8xf32> to vector<1x1x8xf32>
    %21 = vector.broadcast %20 : vector<1x1x8xf32> to vector<16x16x8xf32>
    %22 = arith.mulf %17, %21 : vector<16x16x8xf32>
    %23 = arith.addf %16, %22 : vector<16x16x8xf32>
    %24 = vector.extract_strided_slice %7 {offsets = [0, 2, 0], sizes = [16, 16, 8], strides = [1, 1, 1]} : vector<18x18x8xf32> to vector<16x16x8xf32>
    %25 = vector.extract_strided_slice %8 {offsets = [0, 2, 0], sizes = [1, 1, 8], strides = [1, 1, 1]} : vector<3x3x8xf32> to vector<1x1x8xf32>
    %26 = vector.shape_cast %25 : vector<1x1x8xf32> to vector<8xf32>
    %27 = vector.shape_cast %26 : vector<8xf32> to vector<1x1x8xf32>
    %28 = vector.broadcast %27 : vector<1x1x8xf32> to vector<16x16x8xf32>
    %29 = arith.mulf %24, %28 : vector<16x16x8xf32>
    %30 = arith.addf %23, %29 : vector<16x16x8xf32>
    %31 = vector.extract_strided_slice %7 {offsets = [1, 0, 0], sizes = [16, 16, 8], strides = [1, 1, 1]} : vector<18x18x8xf32> to vector<16x16x8xf32>
    %32 = vector.extract_strided_slice %8 {offsets = [1, 0, 0], sizes = [1, 1, 8], strides = [1, 1, 1]} : vector<3x3x8xf32> to vector<1x1x8xf32>
    %33 = vector.shape_cast %32 : vector<1x1x8xf32> to vector<8xf32>
    %34 = vector.shape_cast %33 : vector<8xf32> to vector<1x1x8xf32>
    %35 = vector.broadcast %34 : vector<1x1x8xf32> to vector<16x16x8xf32>
    %36 = arith.mulf %31, %35 : vector<16x16x8xf32>
    %37 = arith.addf %30, %36 : vector<16x16x8xf32>
    %38 = vector.extract_strided_slice %7 {offsets = [1, 1, 0], sizes = [16, 16, 8], strides = [1, 1, 1]} : vector<18x18x8xf32> to vector<16x16x8xf32>
    %39 = vector.extract_strided_slice %8 {offsets = [1, 1, 0], sizes = [1, 1, 8], strides = [1, 1, 1]} : vector<3x3x8xf32> to vector<1x1x8xf32>
    %40 = vector.shape_cast %39 : vector<1x1x8xf32> to vector<8xf32>
    %41 = vector.shape_cast %40 : vector<8xf32> to vector<1x1x8xf32>
    %42 = vector.broadcast %41 : vector<1x1x8xf32> to vector<16x16x8xf32>
    %43 = arith.mulf %38, %42 : vector<16x16x8xf32>
    %44 = arith.addf %37, %43 : vector<16x16x8xf32>
    %45 = vector.extract_strided_slice %7 {offsets = [1, 2, 0], sizes = [16, 16, 8], strides = [1, 1, 1]} : vector<18x18x8xf32> to vector<16x16x8xf32>
    %46 = vector.extract_strided_slice %8 {offsets = [1, 2, 0], sizes = [1, 1, 8], strides = [1, 1, 1]} : vector<3x3x8xf32> to vector<1x1x8xf32>
    %47 = vector.shape_cast %46 : vector<1x1x8xf32> to vector<8xf32>
    %48 = vector.shape_cast %47 : vector<8xf32> to vector<1x1x8xf32>
    %49 = vector.broadcast %48 : vector<1x1x8xf32> to vector<16x16x8xf32>
    %50 = arith.mulf %45, %49 : vector<16x16x8xf32>
    %51 = arith.addf %44, %50 : vector<16x16x8xf32>
    %52 = vector.extract_strided_slice %7 {offsets = [2, 0, 0], sizes = [16, 16, 8], strides = [1, 1, 1]} : vector<18x18x8xf32> to vector<16x16x8xf32>
    %53 = vector.extract_strided_slice %8 {offsets = [2, 0, 0], sizes = [1, 1, 8], strides = [1, 1, 1]} : vector<3x3x8xf32> to vector<1x1x8xf32>
    %54 = vector.shape_cast %53 : vector<1x1x8xf32> to vector<8xf32>
    %55 = vector.shape_cast %54 : vector<8xf32> to vector<1x1x8xf32>
    %56 = vector.broadcast %55 : vector<1x1x8xf32> to vector<16x16x8xf32>
    %57 = arith.mulf %52, %56 : vector<16x16x8xf32>
    %58 = arith.addf %51, %57 : vector<16x16x8xf32>
    %59 = vector.extract_strided_slice %7 {offsets = [2, 1, 0], sizes = [16, 16, 8], strides = [1, 1, 1]} : vector<18x18x8xf32> to vector<16x16x8xf32>
    %60 = vector.extract_strided_slice %8 {offsets = [2, 1, 0], sizes = [1, 1, 8], strides = [1, 1, 1]} : vector<3x3x8xf32> to vector<1x1x8xf32>
    %61 = vector.shape_cast %60 : vector<1x1x8xf32> to vector<8xf32>
    %62 = vector.shape_cast %61 : vector<8xf32> to vector<1x1x8xf32>
    %63 = vector.broadcast %62 : vector<1x1x8xf32> to vector<16x16x8xf32>
    %64 = arith.mulf %59, %63 : vector<16x16x8xf32>
    %65 = arith.addf %58, %64 : vector<16x16x8xf32>
    %66 = vector.extract_strided_slice %7 {offsets = [2, 2, 0], sizes = [16, 16, 8], strides = [1, 1, 1]} : vector<18x18x8xf32> to vector<16x16x8xf32>
    %67 = vector.extract_strided_slice %8 {offsets = [2, 2, 0], sizes = [1, 1, 8], strides = [1, 1, 1]} : vector<3x3x8xf32> to vector<1x1x8xf32>
    %68 = vector.shape_cast %67 : vector<1x1x8xf32> to vector<8xf32>
    %69 = vector.shape_cast %68 : vector<8xf32> to vector<1x1x8xf32>
    %70 = vector.broadcast %69 : vector<1x1x8xf32> to vector<16x16x8xf32>
    %71 = arith.mulf %66, %70 : vector<16x16x8xf32>
    %72 = arith.addf %65, %71 : vector<16x16x8xf32>
    %cst_14 = arith.constant 0.000000e+00 : f32
    %73 = vector.broadcast %cst_14 : f32 to vector<16x16x8xf32>
    %74 = arith.maximumf %72, %73 : vector<16x16x8xf32>
    %75 = vector.shape_cast %74 : vector<16x16x8xf32> to vector<256x8xf32>
    %c0_15 = arith.constant 0 : index
    %c0_16 = arith.constant 0 : index
    %76 = vector.load %arg3[%c0_15, %c0_16] : memref<16x8xf32, #tpu.memory_space<vmem>>, vector<16x8xf32>
    %77 = tpu.transpose %75, [1, 0] : vector<256x8xf32> -> vector<8x256xf32>
    %cst_17 = arith.constant dense<0.000000e+00> : vector<16x256xf32>
    %78 = tpu.matmul %76, %77, %cst_17 {dimension_numbers = #tpu.dot_dimension_numbers<[1], [0], [0], [1], [0, 0, 1, 1], [], []>} : vector<16x8xf32>, vector<8x256xf32>, vector<16x256xf32> -> vector<16x256xf32>
    %c0_18 = arith.constant 0 : index
    %c0_19 = arith.constant 0 : index
    %79 = vector.load %arg4[%c0_18, %c0_19] : memref<16x1xf32, #tpu.memory_space<vmem>>, vector<16x1xf32>
    %80 = vector.broadcast %79 : vector<16x1xf32> to vector<16x256xf32>
    %81 = arith.addf %78, %80 : vector<16x256xf32>
    %c0_20 = arith.constant 0 : index
    %c0_21 = arith.constant 0 : index
    %c0_22 = arith.constant 0 : index
    %82 = vector.load %arg5[%c0_20, %c0_21, %c0_22] : memref<1x16x256xf32, #tpu.memory_space<vmem>>, vector<1x16x256xf32>
    %83 = vector.shape_cast %82 : vector<1x16x256xf32> to vector<16x256xf32>
    %84 = vector.shape_cast %81 : vector<16x256xf32> to vector<1x16x256xf32>
    tpu.vector_store %arg5[%c0_20, %c0_21, %c0_22], %84 {strides = array<i32>} : memref<1x16x256xf32, #tpu.memory_space<vmem>>, vector<1x16x256xf32>,
    return
  }
  func.func @transform_0(%arg0: i32) -> (i32, i32, i32) {
    %c0_i32 = arith.constant 0 : i32
    %c0_i32_0 = arith.constant 0 : i32
    %c0_i32_1 = arith.constant 0 : i32
    return %arg0, %c0_i32, %c0_i32_0 : i32, i32, i32
  }
  func.func @transform_1(%arg0: i32) -> (i32, i32, i32) {
    %c0_i32 = arith.constant 0 : i32
    %c0_i32_0 = arith.constant 0 : i32
    %c0_i32_1 = arith.constant 0 : i32
    %c0_i32_2 = arith.constant 0 : i32
    return %c0_i32, %c0_i32_0, %c0_i32_1 : i32, i32, i32
  }
  func.func @transform_2(%arg0: i32) -> (i32, i32) {
    %c0_i32 = arith.constant 0 : i32
    %c0_i32_0 = arith.constant 0 : i32
    %c0_i32_1 = arith.constant 0 : i32
    return %c0_i32, %c0_i32_0 : i32, i32
  }
  func.func @transform_3(%arg0: i32) -> (i32, i32) {
    %c0_i32 = arith.constant 0 : i32
    %c0_i32_0 = arith.constant 0 : i32
    %c0_i32_1 = arith.constant 0 : i32
    return %c0_i32, %c0_i32_0 : i32, i32
  }
  func.func @transform_4(%arg0: i32) -> (i32, i32, i32) {
    %c0_i32 = arith.constant 0 : i32
    %c0_i32_0 = arith.constant 0 : i32
    %c0_i32_1 = arith.constant 0 : i32
    return %arg0, %c0_i32, %c0_i32_0 : i32, i32, i32
  }
}

</mosaic_0001>

<llo_original>
// kernel: tpu_custom_call.1
$region0: #{tpu_custom_call.1}
  #allocation0 [shape = 'u32[]', space=smem, size = 0x4, offset = 0x4, fixed_abs, tag = 'smem constant byte address 0x4 - core index']
  #allocation1 [shape = 'u32[144,128]{1,0:T(1,128)}', space=vmem, size = 0x12000, scoped, tag = 'internal scratch']
  #allocation2 [shape = 'f32[18,18,8]{2,1,0:T(8,128)}', space=vmem, size = 0x36000, scoped, tag = 'scratch operand']
  %s0 = inlined_call_operand.vmem [shape: f32[2,8,256], index: 0, kind: input, shape index: {}]
  %s1 = inlined_call_operand.vmem [shape: f32[3,3,8], index: 1, kind: input, shape index: {}]
  %s2 = inlined_call_operand.vmem [shape: f32[16,8], index: 2, kind: input, shape index: {}]
  %s3 = inlined_call_operand.vmem [shape: f32[16,1], index: 3, kind: input, shape index: {}]
  %s4 = inlined_call_operand.hbm [shape: f32[2,16,256], index: 4, kind: output, shape index: {}]
  %s5 = sld [smem:[#allocation0]]
  $region49: #{tpu_custom_call.1} parent=0
    _
  %s7 = ssub.s32 1, %s5
  %s8 = scalar_select 0, %s7, %s5
  $region1: #{tpu_custom_call.1} parent=0
    #allocation3 [shape = 'u8[32768]{0}', space=vmem, size = 0x8000, scoped, tag = 'output window, operand 0']
    #allocation4 [shape = 's32[2]{0}', space=sflag, size = 0x8, scoped, tag = 'scoped memory for tpu_custom_call.1']
    %9 = vsyncpa [#allocation4], 0
    %s10 = scalar_lea.sflag [#allocation4], 1
    %11 = vsyncpa %s10, 0
    loop: start=0, step=1, limit=4
    $region2: #{tpu_custom_call.1} parent=1 // loop_pre_header
      _
    $region3: #{tpu_custom_call.1} parent=1 // loop_header
      %s13 = sphi 0, %s17
      %p14 = scmp.ge.s32.totalorder %s13, 4
      %s23 = sphi 0, %s25
      %s26 = sphi 0, %s23
      %s27 = sphi 0, %s26
      %s43 = sphi 0, %s27
      %s47 = sphi 0, %s47
      %s49 = sphi 0, %s47
      %s50 = sphi 0, %s49
      %s64 = sphi 0, %s50
      %s68 = sphi 0, %s68
      %s70 = sphi 0, %s68
      %s71 = sphi 0, %s70
      %s85 = sphi 0, %s71
      %s89 = sphi 0, %s89
      %s91 = sphi 0, %s89
      %s92 = sphi 0, %s91
      %s106 = sphi 0, %s92
      %s112 = sphi 0, %s114
      %s115 = sphi 0, %s112
      %s116 = sphi 0, %s115
      %s132 = sphi 0, %s116
    $region4: #{tpu_custom_call.1} parent=1 // loop_header_branch
      %16 = sbr.rel (%p14) target = $region8
    $region5: #{tpu_custom_call.1} parent=1 // loop_body
      %s18 = ssub.s32 %s13, 1
      %s19 = ssub.s32 %s13, 2
      %s20 = sadd.s32 %s13, 1
      %s21 = ssub.s32 %s13, %s20
      %p22 = scmp.eq.s32.totalorder %s21, 0
      %s24 = sadd.s32 %s23, 1
      %s25 = scalar_select %p22, %s23, %s24
      %p28 = pneg %p22
      %p29 = scmp.eq.s32.totalorder %s13, 1
      %p30 = por %p28, %p29
      %p31 = scmp.ne.s32.totalorder %s23, %s26
      %p32 = scmp.eq.s32.totalorder %s13, 0
      %p33 = por %p31, %p32
      %p34 = scmp.ne.s32.totalorder %s23, %s26
      %p35 = scmp.eq.s32.totalorder %s18, 1
      %p36 = por %p34, %p35
      %p37 = scmp.ne.s32.totalorder %s26, %s27
      %p38 = scmp.eq.s32.totalorder %s18, 0
      %p39 = por %p37, %p38
      %p40 = scmp.ne.s32.totalorder %s26, %s27
      %p41 = scmp.eq.s32.totalorder %s19, 1
      %p42 = por %p40, %p41
      %p44 = scmp.ne.s32.totalorder %s27, %s43
      %p45 = scmp.eq.s32.totalorder %s19, 0
      %p46 = por %p44, %p45
      %s48 = sadd.s32 %s47, 1
      %p51 = scmp.eq.s32.totalorder %s13, 1
      %p52 = scmp.ne.s32.totalorder %s47, %s49
      %p53 = scmp.eq.s32.totalorder %s13, 0
      %p54 = por %p52, %p53
      %p55 = scmp.ne.s32.totalorder %s47, %s49
      %p56 = scmp.eq.s32.totalorder %s18, 1
      %p57 = por %p55, %p56
      %p58 = scmp.ne.s32.totalorder %s49, %s50
      %p59 = scmp.eq.s32.totalorder %s18, 0
      %p60 = por %p58, %p59
      %p61 = scmp.ne.s32.totalorder %s49, %s50
      %p62 = scmp.eq.s32.totalorder %s19, 1
      %p63 = por %p61, %p62
      %p65 = scmp.ne.s32.totalorder %s50, %s64
      %p66 = scmp.eq.s32.totalorder %s19, 0
      %p67 = por %p65, %p66
      %s69 = sadd.s32 %s68, 1
      %p72 = scmp.eq.s32.totalorder %s13, 1
      %p73 = scmp.ne.s32.totalorder %s68, %s70
      %p74 = scmp.eq.s32.totalorder %s13, 0
      %p75 = por %p73, %p74
      %p76 = scmp.ne.s32.totalorder %s68, %s70
      %p77 = scmp.eq.s32.totalorder %s18, 1
      %p78 = por %p76, %p77
      %p79 = scmp.ne.s32.totalorder %s70, %s71
      %p80 = scmp.eq.s32.totalorder %s18, 0
      %p81 = por %p79, %p80
      %p82 = scmp.ne.s32.totalorder %s70, %s71
      %p83 = scmp.eq.s32.totalorder %s19, 1
      %p84 = por %p82, %p83
      %p86 = scmp.ne.s32.totalorder %s71, %s85
      %p87 = scmp.eq.s32.totalorder %s19, 0
      %p88 = por %p86, %p87
      %s90 = sadd.s32 %s89, 1
      %p93 = scmp.eq.s32.totalorder %s13, 1
      %p94 = scmp.ne.s32.totalorder %s89, %s91
      %p95 = scmp.eq.s32.totalorder %s13, 0
      %p96 = por %p94, %p95
      %p97 = scmp.ne.s32.totalorder %s89, %s91
      %p98 = scmp.eq.s32.totalorder %s18, 1
      %p99 = por %p97, %p98
      %p100 = scmp.ne.s32.totalorder %s91, %s92
      %p101 = scmp.eq.s32.totalorder %s18, 0
      %p102 = por %p100, %p101
      %p103 = scmp.ne.s32.totalorder %s91, %s92
      %p104 = scmp.eq.s32.totalorder %s19, 1
      %p105 = por %p103, %p104
      %p107 = scmp.ne.s32.totalorder %s92, %s106
      %p108 = scmp.eq.s32.totalorder %s19, 0
      %p109 = por %p107, %p108
      %s110 = ssub.s32 %s13, %s20
      %p111 = scmp.eq.s32.totalorder %s110, 0
      %s113 = sadd.s32 %s112, 1
      %s114 = scalar_select %p111, %s112, %s113
      %p117 = pneg %p111
      %p118 = scmp.eq.s32.totalorder %s13, 1
      %p119 = por %p117, %p118
      %p120 = scmp.ne.s32.totalorder %s112, %s115
      %p121 = scmp.eq.s32.totalorder %s13, 0
      %p122 = por %p120, %p121
      %p123 = scmp.ne.s32.totalorder %s112, %s115
      %p124 = scmp.eq.s32.totalorder %s18, 1
      %p125 = por %p123, %p124
      %p126 = scmp.ne.s32.totalorder %s115, %s116
      %p127 = scmp.eq.s32.totalorder %s18, 0
      %p128 = por %p126, %p127
      %p129 = scmp.ne.s32.totalorder %s115, %s116
      %p130 = scmp.eq.s32.totalorder %s19, 1
      %p131 = por %p129, %p130
      %p133 = scmp.ne.s32.totalorder %s116, %s132
      %p134 = scmp.eq.s32.totalorder %s19, 0
      %p135 = por %p133, %p134
      %p136 = scmp.le.s32.totalorder 1, %s13
      %p137 = scmp.lt.s32.totalorder %s13, 3
      %p138 = pnand %p136, %p137
      %p139 = pneg %p138
      // Predicated region
      $region9: #{tpu_custom_call.1} parent=5 // pred_check
        _
      $region10: #{tpu_custom_call.1} parent=5 // pred_check_branch
        %141 = sbr.rel (%p138) target = $region12
      $region11: #{tpu_custom_call.1} parent=5 // pred_region
        %s142 = ssub.s32 %s13, 1
        // Predicated region
        $region13: #{tpu_custom_call.1} parent=11 // pred_check
          %p143 = pneg %p60
        $region14: #{tpu_custom_call.1} parent=11 // pred_check_branch
          %145 = sbr.rel (%p143) target = $region16
        $region15: #{tpu_custom_call.1} parent=11 // pred_region
          _
        $region16: #{tpu_custom_call.1} parent=11 // pred_fallthru
          _
        // Predicated region
        $region17: #{tpu_custom_call.1} parent=11 // pred_check
          %p146 = pneg %p81
        $region18: #{tpu_custom_call.1} parent=11 // pred_check_branch
          %148 = sbr.rel (%p146) target = $region20
        $region19: #{tpu_custom_call.1} parent=11 // pred_region
          _
        $region20: #{tpu_custom_call.1} parent=11 // pred_fallthru
          _
        // Predicated region
        $region21: #{tpu_custom_call.1} parent=11 // pred_check
          %p149 = pneg %p102
        $region22: #{tpu_custom_call.1} parent=11 // pred_check_branch
          %151 = sbr.rel (%p149) target = $region24
        $region23: #{tpu_custom_call.1} parent=11 // pred_region
          _
        $region24: #{tpu_custom_call.1} parent=11 // pred_fallthru
          _
      $region12: #{tpu_custom_call.1} parent=5 // pred_fallthru
        _
      %p152 = scmp.lt.s32.totalorder %s13, 2
      // Predicated region
      $region25: #{tpu_custom_call.1} parent=5 // pred_check
        %p153 = pneg %p152
      $region26: #{tpu_custom_call.1} parent=5 // pred_check_branch
        %155 = sbr.rel (%p153) target = $region28
      $region27: #{tpu_custom_call.1} parent=5 // pred_region
        // Predicated region
        $region29: #{tpu_custom_call.1} parent=27 // pred_check
          %p156 = pneg %p33
        $region30: #{tpu_custom_call.1} parent=27 // pred_check_branch
          %158 = sbr.rel (%p156) target = $region32
        $region31: #{tpu_custom_call.1} parent=27 // pred_region
          %p159 = scmp.lt.s32.totalorder %s13, 1
          %s160 = scalar_select %p159, %s13, 1
          %s161 = smul.addr %s160, 2
          %s162 = smul.addr %s161, 8
          %s163 = scalar_lea.vmem %s0, %s162
        $region32: #{tpu_custom_call.1} parent=27 // pred_fallthru
          _
      $region28: #{tpu_custom_call.1} parent=5 // pred_fallthru
        _
      %p164 = scmp.le.s32.totalorder 1, %s13
      %p165 = scmp.lt.s32.totalorder %s13, 3
      %p166 = pnand %p164, %p165
      %p167 = pneg %p166
      // Predicated region
      $region33: #{tpu_custom_call.1} parent=5 // pred_check
        _
      $region34: #{tpu_custom_call.1} parent=5 // pred_check_branch
        %169 = sbr.rel (%p166) target = $region36
      $region35: #{tpu_custom_call.1} parent=5 // pred_region
        %s170 = ssub.s32 %s13, 1
        %p171 = scmp.lt.s32.totalorder %s18, 1
        %s172 = scalar_select %p171, %s18, 1
        %s173 = smul.addr %s172, 2
        %s174 = smul.addr %s173, 8
        %s175 = scalar_lea.vmem %s0, %s174
        %p176 = pneg %p39
        %p177 = pneg %p36
        %p178 = pneg %p60
        %p179 = pneg %p57
        %p180 = pneg %p81
        %p181 = pneg %p78
        %p182 = pneg %p102
        %p183 = pneg %p99
        %p184 = pneg %p128
        %p185 = pneg %p125
        %s186 = sand.u32 %s115, 1
        %s187 = scalar_lea.sflag [#allocation4], %s186
        %s188 = sand.u32 %s115, 1
        %s189 = smul.addr %s188, 32
        %s190 = scalar_lea.vmem [#allocation3], %s189
        %p191 = scmp.lt.s32.totalorder %s18, 1
        %s192 = scalar_select %p191, %s18, 1
        %s193 = smul.addr %s192, 2
        %s194 = smul.addr %s193, 8
        %s195 = scalar_lea.vmem %s0, %s194
        %v196 = vld [vmem:[%s195] sm:$0xff]
        %v197 = vld [vmem:[%s195 + $0x8] sm:$0xff]
        %198 = vxpose.xlu0.b32.start [1/16] %v196, 128
        %199 = vxpose.xlu0.b32.cont [2/16] 0.0, 128
        %200 = vxpose.xlu0.b32.cont [3/16] 0.0, 128
        %201 = vxpose.xlu0.b32.cont [4/16] 0.0, 128
        %202 = vxpose.xlu0.b32.cont [5/16] 0.0, 128
        %203 = vxpose.xlu0.b32.cont [6/16] 0.0, 128
        %204 = vxpose.xlu0.b32.cont [7/16] 0.0, 128
        %205 = vxpose.xlu0.b32.cont [8/16] 0.0, 128
        %206 = vxpose.xlu0.b32.cont [9/16] 0.0, 128
        %207 = vxpose.xlu0.b32.cont [10/16] 0.0, 128
        %208 = vxpose.xlu0.b32.cont [11/16] 0.0, 128
        %209 = vxpose.xlu0.b32.cont [12/16] 0.0, 128
        %210 = vxpose.xlu0.b32.cont [13/16] 0.0, 128
        %211 = vxpose.xlu0.b32.cont [14/16] 0.0, 128
        %212 = vxpose.xlu0.b32.cont [15/16] 0.0, 128
        %213 = vxpose.xlu0.b32.end [16/16] 0.0, 128
        %v214 = vpop.trf.xlu0
        %v215 = vpop.trf.xlu0
        %v216 = vpop.trf.xlu0
        %v217 = vpop.trf.xlu0
        %v218 = vpop.trf.xlu0
        %v219 = vpop.trf.xlu0
        %v220 = vpop.trf.xlu0
        %v221 = vpop.trf.xlu0
        %v222 = vpop.trf.xlu0
        %v223 = vpop.trf.xlu0
        %v224 = vpop.trf.xlu0
        %v225 = vpop.trf.xlu0
        %v226 = vpop.trf.xlu0
        %v227 = vpop.trf.xlu0
        %v228 = vpop.trf.xlu0
        %v229 = vpop.trf.xlu0
        %230 = vxpose.xlu0.b32.start [1/16] %v197, 128
        %231 = vxpose.xlu0.b32.cont [2/16] 0.0, 128
        %232 = vxpose.xlu0.b32.cont [3/16] 0.0, 128
        %233 = vxpose.xlu0.b32.cont [4/16] 0.0, 128
        %234 = vxpose.xlu0.b32.cont [5/16] 0.0, 128
        %235 = vxpose.xlu0.b32.cont [6/16] 0.0, 128
        %236 = vxpose.xlu0.b32.cont [7/16] 0.0, 128
        %237 = vxpose.xlu0.b32.cont [8/16] 0.0, 128
        %238 = vxpose.xlu0.b32.cont [9/16] 0.0, 128
        %239 = vxpose.xlu0.b32.cont [10/16] 0.0, 128
        %240 = vxpose.xlu0.b32.cont [11/16] 0.0, 128
        %241 = vxpose.xlu0.b32.cont [12/16] 0.0, 128
        %242 = vxpose.xlu0.b32.cont [13/16] 0.0, 128
        %243 = vxpose.xlu0.b32.cont [14/16] 0.0, 128
        %244 = vxpose.xlu0.b32.cont [15/16] 0.0, 128
        %245 = vxpose.xlu0.b32.end [16/16] 0.0, 128
        %v246 = vpop.trf.xlu0
        %v247 = vpop.trf.xlu0
        %v248 = vpop.trf.xlu0
        %v249 = vpop.trf.xlu0
        %v250 = vpop.trf.xlu0
        %v251 = vpop.trf.xlu0
        %v252 = vpop.trf.xlu0
        %v253 = vpop.trf.xlu0
        %v254 = vpop.trf.xlu0
        %v255 = vpop.trf.xlu0
        %v256 = vpop.trf.xlu0
        %v257 = vpop.trf.xlu0
        %v258 = vpop.trf.xlu0
        %v259 = vpop.trf.xlu0
        %v260 = vpop.trf.xlu0
        %v261 = vpop.trf.xlu0
        %vm262 = vcmask 64512
        %263 = vst.msk [vmem:[#allocation2] sm:$0xff] %vm262, 0.0
        %264 = vst.msk [vmem:[#allocation2 + $0x8] sm:$0xff] %vm262, 0.0
        %vm265 = vcmask 58368
        %266 = vst.msk [vmem:[#allocation2 + $0x10] sm:$0x3] %vm265, 0.0
        %267 = vst.msk [vmem:[#allocation2 + $0x18] sm:$0xff] %vm262, 0.0
        %268 = vst.msk [vmem:[#allocation2 + $0x20] sm:$0xff] %vm262, 0.0
        %269 = vst.msk [vmem:[#allocation2 + $0x28] sm:$0x3] %vm265, 0.0
        %270 = vst.msk [vmem:[#allocation2 + $0x30] sm:$0xff] %vm262, 0.0
        %271 = vst.msk [vmem:[#allocation2 + $0x38] sm:$0xff] %vm262, 0.0
        %272 = vst.msk [vmem:[#allocation2 + $0x40] sm:$0x3] %vm265, 0.0
        %273 = vst.msk [vmem:[#allocation2 + $0x48] sm:$0xff] %vm262, 0.0
        %274 = vst.msk [vmem:[#allocation2 + $0x50] sm:$0xff] %vm262, 0.0
        %275 = vst.msk [vmem:[#allocation2 + $0x58] sm:$0x3] %vm265, 0.0
        %276 = vst.msk [vmem:[#allocation2 + $0x60] sm:$0xff] %vm262, 0.0
        %277 = vst.msk [vmem:[#allocation2 + $0x68] sm:$0xff] %vm262, 0.0
        %278 = vst.msk [vmem:[#allocation2 + $0x70] sm:$0x3] %vm265, 0.0
        %279 = vst.msk [vmem:[#allocation2 + $0x78] sm:$0xff] %vm262, 0.0
        %280 = vst.msk [vmem:[#allocation2 + $0x80] sm:$0xff] %vm262, 0.0
        %281 = vst.msk [vmem:[#allocation2 + $0x88] sm:$0x3] %vm265, 0.0
        %282 = vst.msk [vmem:[#allocation2 + $0x90] sm:$0xff] %vm262, 0.0
        %283 = vst.msk [vmem:[#allocation2 + $0x98] sm:$0xff] %vm262, 0.0
        %284 = vst.msk [vmem:[#allocation2 + $0xa0] sm:$0x3] %vm265, 0.0
        %285 = vst.msk [vmem:[#allocation2 + $0xa8] sm:$0xff] %vm262, 0.0
        %286 = vst.msk [vmem:[#allocation2 + $0xb0] sm:$0xff] %vm262, 0.0
        %287 = vst.msk [vmem:[#allocation2 + $0xb8] sm:$0x3] %vm265, 0.0
        %288 = vst.msk [vmem:[#allocation2 + $0xc0] sm:$0xff] %vm262, 0.0
        %289 = vst.msk [vmem:[#allocation2 + $0xc8] sm:$0xff] %vm262, 0.0
        %290 = vst.msk [vmem:[#allocation2 + $0xd0] sm:$0x3] %vm265, 0.0
        %291 = vst.msk [vmem:[#allocation2 + $0xd8] sm:$0xff] %vm262, 0.0
        %292 = vst.msk [vmem:[#allocation2 + $0xe0] sm:$0xff] %vm262, 0.0
        %293 = vst.msk [vmem:[#allocation2 + $0xe8] sm:$0x3] %vm265, 0.0
        %294 = vst.msk [vmem:[#allocation2 + $0xf0] sm:$0xff] %vm262, 0.0
        %295 = vst.msk [vmem:[#allocation2 + $0xf8] sm:$0xff] %vm262, 0.0
        %296 = vst.msk [vmem:[#allocation2 + $0x100] sm:$0x3] %vm265, 0.0
        %297 = vst.msk [vmem:[#allocation2 + $0x108] sm:$0xff] %vm262, 0.0
        %298 = vst.msk [vmem:[#allocation2 + $0x110] sm:$0xff] %vm262, 0.0
        %299 = vst.msk [vmem:[#allocation2 + $0x118] sm:$0x3] %vm265, 0.0
        %300 = vst.msk [vmem:[#allocation2 + $0x120] sm:$0xff] %vm262, 0.0
        %301 = vst.msk [vmem:[#allocation2 + $0x128] sm:$0xff] %vm262, 0.0
        %302 = vst.msk [vmem:[#allocation2 + $0x130] sm:$0x3] %vm265, 0.0
        %303 = vst.msk [vmem:[#allocation2 + $0x138] sm:$0xff] %vm262, 0.0
        %304 = vst.msk [vmem:[#allocation2 + $0x140] sm:$0xff] %vm262, 0.0
        %305 = vst.msk [vmem:[#allocation2 + $0x148] sm:$0x3] %vm265, 0.0
        %306 = vst.msk [vmem:[#allocation2 + $0x150] sm:$0xff] %vm262, 0.0
        %307 = vst.msk [vmem:[#allocation2 + $0x158] sm:$0xff] %vm262, 0.0
        %308 = vst.msk [vmem:[#allocation2 + $0x160] sm:$0x3] %vm265, 0.0
        %309 = vst.msk [vmem:[#allocation2 + $0x168] sm:$0xff] %vm262, 0.0
        %310 = vst.msk [vmem:[#allocation2 + $0x170] sm:$0xff] %vm262, 0.0
        %311 = vst.msk [vmem:[#allocation2 + $0x178] sm:$0x3] %vm265, 0.0
        %312 = vst.msk [vmem:[#allocation2 + $0x180] sm:$0xff] %vm262, 0.0
        %313 = vst.msk [vmem:[#allocation2 + $0x188] sm:$0xff] %vm262, 0.0
        %314 = vst.msk [vmem:[#allocation2 + $0x190] sm:$0x3] %vm265, 0.0
        %315 = vst.msk [vmem:[#allocation2 + $0x198] sm:$0xff] %vm262, 0.0
        %316 = vst.msk [vmem:[#allocation2 + $0x1a0] sm:$0xff] %vm262, 0.0
        %317 = vst.msk [vmem:[#allocation2 + $0x1a8] sm:$0x3] %vm265, 0.0
        %s318 = scalar_lea.vmem [#allocation2], 24
        %319 = vst.msk [vmem:[%s318 + $0x1] sm:$0xff] %vm262, %v214
        %320 = vst.msk [vmem:[%s318 + $0x9] sm:$0xff] %vm262, %v215
        %321 = vst.msk [vmem:[%s318 + $0x19] sm:$0xff] %vm262, %v216
        %322 = vst.msk [vmem:[%s318 + $0x21] sm:$0xff] %vm262, %v217
        %323 = vst.msk [vmem:[%s318 + $0x31] sm:$0xff] %vm262, %v218
        %324 = vst.msk [vmem:[%s318 + $0x39] sm:$0xff] %vm262, %v219
        %325 = vst.msk [vmem:[%s318 + $0x49] sm:$0xff] %vm262, %v220
        %326 = vst.msk [vmem:[%s318 + $0x51] sm:$0xff] %vm262, %v221
        %327 = vst.msk [vmem:[%s318 + $0x61] sm:$0xff] %vm262, %v222
        %328 = vst.msk [vmem:[%s318 + $0x69] sm:$0xff] %vm262, %v223
        %329 = vst.msk [vmem:[%s318 + $0x79] sm:$0xff] %vm262, %v224
        %330 = vst.msk [vmem:[%s318 + $0x81] sm:$0xff] %vm262, %v225
        %331 = vst.msk [vmem:[%s318 + $0x91] sm:$0xff] %vm262, %v226
        %332 = vst.msk [vmem:[%s318 + $0x99] sm:$0xff] %vm262, %v227
        %333 = vst.msk [vmem:[%s318 + $0xa9] sm:$0xff] %vm262, %v228
        %334 = vst.msk [vmem:[%s318 + $0xb1] sm:$0xff] %vm262, %v229
        %335 = vst.msk [vmem:[%s318 + $0xc1] sm:$0xff] %vm262, %v246
        %336 = vst.msk [vmem:[%s318 + $0xc9] sm:$0xff] %vm262, %v247
        %337 = vst.msk [vmem:[%s318 + $0xd9] sm:$0xff] %vm262, %v248
        %338 = vst.msk [vmem:[%s318 + $0xe1] sm:$0xff] %vm262, %v249
        %339 = vst.msk [vmem:[%s318 + $0xf1] sm:$0xff] %vm262, %v250
        %340 = vst.msk [vmem:[%s318 + $0xf9] sm:$0xff] %vm262, %v251
        %341 = vst.msk [vmem:[%s318 + $0x109] sm:$0xff] %vm262, %v252
        %342 = vst.msk [vmem:[%s318 + $0x111] sm:$0xff] %vm262, %v253
        %343 = vst.msk [vmem:[%s318 + $0x121] sm:$0xff] %vm262, %v254
        %344 = vst.msk [vmem:[%s318 + $0x129] sm:$0xff] %vm262, %v255
        %345 = vst.msk [vmem:[%s318 + $0x139] sm:$0xff] %vm262, %v256
        %346 = vst.msk [vmem:[%s318 + $0x141] sm:$0xff] %vm262, %v257
        %347 = vst.msk [vmem:[%s318 + $0x151] sm:$0xff] %vm262, %v258
        %348 = vst.msk [vmem:[%s318 + $0x159] sm:$0xff] %vm262, %v259
        %349 = vst.msk [vmem:[%s318 + $0x169] sm:$0xff] %vm262, %v260
        %350 = vst.msk [vmem:[%s318 + $0x171] sm:$0xff] %vm262, %v261
        %v351 = vld [vmem:[#allocation2] sm:$0xff]
        %v352 = vld [vmem:[#allocation2 + $0x8] sm:$0xff]
        %v353 = vld [vmem:[#allocation2 + $0x10] sm:$0x3]
        %v354 = vld [vmem:[#allocation2 + $0x18] sm:$0xff]
        %v355 = vld [vmem:[#allocation2 + $0x20] sm:$0xff]
        %v356 = vld [vmem:[#allocation2 + $0x28] sm:$0x3]
        %v357 = vld [vmem:[#allocation2 + $0x30] sm:$0xff]
        %v358 = vld [vmem:[#allocation2 + $0x38] sm:$0xff]
        %v359 = vld [vmem:[#allocation2 + $0x40] sm:$0x3]
        %v360 = vld [vmem:[#allocation2 + $0x48] sm:$0xff]
        %v361 = vld [vmem:[#allocation2 + $0x50] sm:$0xff]
        %v362 = vld [vmem:[#allocation2 + $0x58] sm:$0x3]
        %v363 = vld [vmem:[#allocation2 + $0x60] sm:$0xff]
        %v364 = vld [vmem:[#allocation2 + $0x68] sm:$0xff]
        %v365 = vld [vmem:[#allocation2 + $0x70] sm:$0x3]
        %v366 = vld [vmem:[#allocation2 + $0x78] sm:$0xff]
        %v367 = vld [vmem:[#allocation2 + $0x80] sm:$0xff]
        %v368 = vld [vmem:[#allocation2 + $0x88] sm:$0x3]
        %v369 = vld [vmem:[#allocation2 + $0x90] sm:$0xff]
        %v370 = vld [vmem:[#allocation2 + $0x98] sm:$0xff]
        %v371 = vld [vmem:[#allocation2 + $0xa0] sm:$0x3]
        %v372 = vld [vmem:[#allocation2 + $0xa8] sm:$0xff]
        %v373 = vld [vmem:[#allocation2 + $0xb0] sm:$0xff]
        %v374 = vld [vmem:[#allocation2 + $0xb8] sm:$0x3]
        %v375 = vld [vmem:[#allocation2 + $0xc0] sm:$0xff]
        %v376 = vld [vmem:[#allocation2 + $0xc8] sm:$0xff]
        %v377 = vld [vmem:[#allocation2 + $0xd0] sm:$0x3]
        %v378 = vld [vmem:[#allocation2 + $0xd8] sm:$0xff]
        %v379 = vld [vmem:[#allocation2 + $0xe0] sm:$0xff]
        %v380 = vld [vmem:[#allocation2 + $0xe8] sm:$0x3]
        %v381 = vld [vmem:[#allocation2 + $0xf0] sm:$0xff]
        %v382 = vld [vmem:[#allocation2 + $0xf8] sm:$0xff]
        %v383 = vld [vmem:[#allocation2 + $0x100] sm:$0x3]
        %v384 = vld [vmem:[#allocation2 + $0x108] sm:$0xff]
        %v385 = vld [vmem:[#allocation2 + $0x110] sm:$0xff]
        %v386 = vld [vmem:[#allocation2 + $0x118] sm:$0x3]
        %v387 = vld [vmem:[#allocation2 + $0x120] sm:$0xff]
        %v388 = vld [vmem:[#allocation2 + $0x128] sm:$0xff]
        %v389 = vld [vmem:[#allocation2 + $0x130] sm:$0x3]
        %v390 = vld [vmem:[#allocation2 + $0x138] sm:$0xff]
        %v391 = vld [vmem:[#allocation2 + $0x140] sm:$0xff]
        %v392 = vld [vmem:[#allocation2 + $0x148] sm:$0x3]
        %v393 = vld [vmem:[#allocation2 + $0x150] sm:$0xff]
        %v394 = vld [vmem:[#allocation2 + $0x158] sm:$0xff]
        %v395 = vld [vmem:[#allocation2 + $0x160] sm:$0x3]
        %v396 = vld [vmem:[#allocation2 + $0x168] sm:$0xff]
        %v397 = vld [vmem:[#allocation2 + $0x170] sm:$0xff]
        %v398 = vld [vmem:[#allocation2 + $0x178] sm:$0x3]
        %v399 = vld [vmem:[#allocation2 + $0x180] sm:$0xff]
        %v400 = vld [vmem:[#allocation2 + $0x188] sm:$0xff]
        %v401 = vld [vmem:[#allocation2 + $0x190] sm:$0x3]
        %v402 = vld [vmem:[#allocation2 + $0x198] sm:$0xff]
        %v403 = vld [vmem:[#allocation2 + $0x1a0] sm:$0xff]
        %v404 = vld [vmem:[#allocation2 + $0x1a8] sm:$0x3]
        %v405 = vld [vmem:[%s1] sm:$0x7]
        %v406 = vld [vmem:[%s1 + $0x4] sm:$0x7]
        %v407 = vld [vmem:[%s1 + $0x8] sm:$0x7]
        %v408 = vlaneseq
        %v409 = vshrl.u32 %v408, 7
        %v410 = vsub.s32 0, %v409
        %v411 = vrot.slane %v405, %v410
        %v412 = vmul.f32 %v351, %v411
        %v413 = vmul.f32 %v352, %v411
        %v414 = vmul.f32 %v354, %v411
        %v415 = vmul.f32 %v355, %v411
        %v416 = vmul.f32 %v357, %v411
        %v417 = vmul.f32 %v358, %v411
        %v418 = vmul.f32 %v360, %v411
        %v419 = vmul.f32 %v361, %v411
        %v420 = vmul.f32 %v363, %v411
        %v421 = vmul.f32 %v364, %v411
        %v422 = vmul.f32 %v366, %v411
        %v423 = vmul.f32 %v367, %v411
        %v424 = vmul.f32 %v369, %v411
        %v425 = vmul.f32 %v370, %v411
        %v426 = vmul.f32 %v372, %v411
        %v427 = vmul.f32 %v373, %v411
        %v428 = vmul.f32 %v375, %v411
        %v429 = vmul.f32 %v376, %v411
        %v430 = vmul.f32 %v378, %v411
        %v431 = vmul.f32 %v379, %v411
        %v432 = vmul.f32 %v381, %v411
        %v433 = vmul.f32 %v382, %v411
        %v434 = vmul.f32 %v384, %v411
        %v435 = vmul.f32 %v385, %v411
        %v436 = vmul.f32 %v387, %v411
        %v437 = vmul.f32 %v388, %v411
        %v438 = vmul.f32 %v390, %v411
        %v439 = vmul.f32 %v391, %v411
        %v440 = vmul.f32 %v393, %v411
        %v441 = vmul.f32 %v394, %v411
        %v442 = vmul.f32 %v396, %v411
        %v443 = vmul.f32 %v397, %v411
        %v444 = vadd.f32 %v412, 0.0
        %v445 = vadd.f32 %v413, 0.0
        %v446 = vadd.f32 %v414, 0.0
        %v447 = vadd.f32 %v415, 0.0
        %v448 = vadd.f32 %v416, 0.0
        %v449 = vadd.f32 %v417, 0.0
        %v450 = vadd.f32 %v418, 0.0
        %v451 = vadd.f32 %v419, 0.0
        %v452 = vadd.f32 %v420, 0.0
        %v453 = vadd.f32 %v421, 0.0
        %v454 = vadd.f32 %v422, 0.0
        %v455 = vadd.f32 %v423, 0.0
        %v456 = vadd.f32 %v424, 0.0
        %v457 = vadd.f32 %v425, 0.0
        %v458 = vadd.f32 %v426, 0.0
        %v459 = vadd.f32 %v427, 0.0
        %v460 = vadd.f32 %v428, 0.0
        %v461 = vadd.f32 %v429, 0.0
        %v462 = vadd.f32 %v430, 0.0
        %v463 = vadd.f32 %v431, 0.0
        %v464 = vadd.f32 %v432, 0.0
        %v465 = vadd.f32 %v433, 0.0
        %v466 = vadd.f32 %v434, 0.0
        %v467 = vadd.f32 %v435, 0.0
        %v468 = vadd.f32 %v436, 0.0
        %v469 = vadd.f32 %v437, 0.0
        %v470 = vadd.f32 %v438, 0.0
        %v471 = vadd.f32 %v439, 0.0
        %v472 = vadd.f32 %v440, 0.0
        %v473 = vadd.f32 %v441, 0.0
        %v474 = vadd.f32 %v442, 0.0
        %v475 = vadd.f32 %v443, 0.0
        %v476 = vlaneseq
        %v477 = vshrl.u32 %v476, 7
        %v478 = vsub.s32 1, %v477
        %v479 = vrot.slane %v405, %v478
        %v480 = vmul.f32 %v351, %v479
        %v481 = vmul.f32 %v352, %v479
        %v482 = vmul.f32 %v353, %v479
        %v483 = vmul.f32 %v354, %v479
        %v484 = vmul.f32 %v355, %v479
        %v485 = vmul.f32 %v356, %v479
        %v486 = vmul.f32 %v357, %v479
        %v487 = vmul.f32 %v358, %v479
        %v488 = vmul.f32 %v359, %v479
        %v489 = vmul.f32 %v360, %v479
        %v490 = vmul.f32 %v361, %v479
        %v491 = vmul.f32 %v362, %v479
        %v492 = vmul.f32 %v363, %v479
        %v493 = vmul.f32 %v364, %v479
        %v494 = vmul.f32 %v365, %v479
        %v495 = vmul.f32 %v366, %v479
        %v496 = vmul.f32 %v367, %v479
        %v497 = vmul.f32 %v368, %v479
        %v498 = vmul.f32 %v369, %v479
        %v499 = vmul.f32 %v370, %v479
        %v500 = vmul.f32 %v371, %v479
        %v501 = vmul.f32 %v372, %v479
        %v502 = vmul.f32 %v373, %v479
        %v503 = vmul.f32 %v374, %v479
        %v504 = vmul.f32 %v375, %v479
        %v505 = vmul.f32 %v376, %v479
        %v506 = vmul.f32 %v377, %v479
        %v507 = vmul.f32 %v378, %v479
        %v508 = vmul.f32 %v379, %v479
        %v509 = vmul.f32 %v380, %v479
        %v510 = vmul.f32 %v381, %v479
        %v511 = vmul.f32 %v382, %v479
        %v512 = vmul.f32 %v383, %v479
        %v513 = vmul.f32 %v384, %v479
        %v514 = vmul.f32 %v385, %v479
        %v515 = vmul.f32 %v386, %v479
        %v516 = vmul.f32 %v387, %v479
        %v517 = vmul.f32 %v388, %v479
        %v518 = vmul.f32 %v389, %v479
        %v519 = vmul.f32 %v390, %v479
        %v520 = vmul.f32 %v391, %v479
        %v521 = vmul.f32 %v392, %v479
        %v522 = vmul.f32 %v393, %v479
        %v523 = vmul.f32 %v394, %v479
        %v524 = vmul.f32 %v395, %v479
        %v525 = vmul.f32 %v396, %v479
        %v526 = vmul.f32 %v397, %v479
        %v527 = vmul.f32 %v398, %v479
        %vm576 = vcmask 1046528
        %v577 = vrot.slane %v480, 1
        %v578 = vrot.slane %v481, 1
        %v579 = vsel %vm576, %v577, %v578
        %v580 = vrot.slane %v482, 1
        %v581 = vsel %vm576, %v578, %v580
        %v582 = vrot.slane %v483, 1
        %v583 = vrot.slane %v484, 1
        %v584 = vsel %vm576, %v582, %v583
        %v585 = vrot.slane %v485, 1
        %v586 = vsel %vm576, %v583, %v585
        %v587 = vrot.slane %v486, 1
        %v588 = vrot.slane %v487, 1
        %v589 = vsel %vm576, %v587, %v588
        %v590 = vrot.slane %v488, 1
        %v591 = vsel %vm576, %v588, %v590
        %v592 = vrot.slane %v489, 1
        %v593 = vrot.slane %v490, 1
        %v594 = vsel %vm576, %v592, %v593
        %v595 = vrot.slane %v491, 1
        %v596 = vsel %vm576, %v593, %v595
        %v597 = vrot.slane %v492, 1
        %v598 = vrot.slane %v493, 1
        %v599 = vsel %vm576, %v597, %v598
        %v600 = vrot.slane %v494, 1
        %v601 = vsel %vm576, %v598, %v600
        %v602 = vrot.slane %v495, 1
        %v603 = vrot.slane %v496, 1
        %v604 = vsel %vm576, %v602, %v603
        %v605 = vrot.slane %v497, 1
        %v606 = vsel %vm576, %v603, %v605
        %v607 = vrot.slane %v498, 1
        %v608 = vrot.slane %v499, 1
        %v609 = vsel %vm576, %v607, %v608
        %v610 = vrot.slane %v500, 1
        %v611 = vsel %vm576, %v608, %v610
        %v612 = vrot.slane %v501, 1
        %v613 = vrot.slane %v502, 1
        %v614 = vsel %vm576, %v612, %v613
        %v615 = vrot.slane %v503, 1
        %v616 = vsel %vm576, %v613, %v615
        %v617 = vrot.slane %v504, 1
        %v618 = vrot.slane %v505, 1
        %v619 = vsel %vm576, %v617, %v618
        %v620 = vrot.slane %v506, 1
        %v621 = vsel %vm576, %v618, %v620
        %v622 = vrot.slane %v507, 1
        %v623 = vrot.slane %v508, 1
        %v624 = vsel %vm576, %v622, %v623
        %v625 = vrot.slane %v509, 1
        %v626 = vsel %vm576, %v623, %v625
        %v627 = vrot.slane %v510, 1
        %v628 = vrot.slane %v511, 1
        %v629 = vsel %vm576, %v627, %v628
        %v630 = vrot.slane %v512, 1
        %v631 = vsel %vm576, %v628, %v630
        %v632 = vrot.slane %v513, 1
        %v633 = vrot.slane %v514, 1
        %v634 = vsel %vm576, %v632, %v633
        %v635 = vrot.slane %v515, 1
        %v636 = vsel %vm576, %v633, %v635
        %v637 = vrot.slane %v516, 1
        %v638 = vrot.slane %v517, 1
        %v639 = vsel %vm576, %v637, %v638
        %v640 = vrot.slane %v518, 1
        %v641 = vsel %vm576, %v638, %v640
        %v642 = vrot.slane %v519, 1
        %v643 = vrot.slane %v520, 1
        %v644 = vsel %vm576, %v642, %v643
        %v645 = vrot.slane %v521, 1
        %v646 = vsel %vm576, %v643, %v645
        %v647 = vrot.slane %v522, 1
        %v648 = vrot.slane %v523, 1
        %v649 = vsel %vm576, %v647, %v648
        %v650 = vrot.slane %v524, 1
        %v651 = vsel %vm576, %v648, %v650
        %v652 = vrot.slane %v525, 1
        %v653 = vrot.slane %v526, 1
        %v654 = vsel %vm576, %v652, %v653
        %v655 = vrot.slane %v527, 1
        %v656 = vsel %vm576, %v653, %v655
        %v689 = vadd.f32 %v444, %v579
        %v690 = vadd.f32 %v445, %v581
        %v691 = vadd.f32 %v446, %v584
        %v692 = vadd.f32 %v447, %v586
        %v693 = vadd.f32 %v448, %v589
        %v694 = vadd.f32 %v449, %v591
        %v695 = vadd.f32 %v450, %v594
        %v696 = vadd.f32 %v451, %v596
        %v697 = vadd.f32 %v452, %v599
        %v698 = vadd.f32 %v453, %v601
        %v699 = vadd.f32 %v454, %v604
        %v700 = vadd.f32 %v455, %v606
        %v701 = vadd.f32 %v456, %v609
        %v702 = vadd.f32 %v457, %v611
        %v703 = vadd.f32 %v458, %v614
        %v704 = vadd.f32 %v459, %v616
        %v705 = vadd.f32 %v460, %v619
        %v706 = vadd.f32 %v461, %v621
        %v707 = vadd.f32 %v462, %v624
        %v708 = vadd.f32 %v463, %v626
        %v709 = vadd.f32 %v464, %v629
        %v710 = vadd.f32 %v465, %v631
        %v711 = vadd.f32 %v466, %v634
        %v712 = vadd.f32 %v467, %v636
        %v713 = vadd.f32 %v468, %v639
        %v714 = vadd.f32 %v469, %v641
        %v715 = vadd.f32 %v470, %v644
        %v716 = vadd.f32 %v471, %v646
        %v717 = vadd.f32 %v472, %v649
        %v718 = vadd.f32 %v473, %v651
        %v719 = vadd.f32 %v474, %v654
        %v720 = vadd.f32 %v475, %v656
        %v721 = vlaneseq
        %v722 = vshrl.u32 %v721, 7
        %v723 = vsub.s32 2, %v722
        %v724 = vrot.slane %v405, %v723
        %v725 = vmul.f32 %v351, %v724
        %v726 = vmul.f32 %v352, %v724
        %v727 = vmul.f32 %v353, %v724
        %v728 = vmul.f32 %v354, %v724
        %v729 = vmul.f32 %v355, %v724
        %v730 = vmul.f32 %v356, %v724
        %v731 = vmul.f32 %v357, %v724
        %v732 = vmul.f32 %v358, %v724
        %v733 = vmul.f32 %v359, %v724
        %v734 = vmul.f32 %v360, %v724
        %v735 = vmul.f32 %v361, %v724
        %v736 = vmul.f32 %v362, %v724
        %v737 = vmul.f32 %v363, %v724
        %v738 = vmul.f32 %v364, %v724
        %v739 = vmul.f32 %v365, %v724
        %v740 = vmul.f32 %v366, %v724
        %v741 = vmul.f32 %v367, %v724
        %v742 = vmul.f32 %v368, %v724
        %v743 = vmul.f32 %v369, %v724
        %v744 = vmul.f32 %v370, %v724
        %v745 = vmul.f32 %v371, %v724
        %v746 = vmul.f32 %v372, %v724
        %v747 = vmul.f32 %v373, %v724
        %v748 = vmul.f32 %v374, %v724
        %v749 = vmul.f32 %v375, %v724
        %v750 = vmul.f32 %v376, %v724
        %v751 = vmul.f32 %v377, %v724
        %v752 = vmul.f32 %v378, %v724
        %v753 = vmul.f32 %v379, %v724
        %v754 = vmul.f32 %v380, %v724
        %v755 = vmul.f32 %v381, %v724
        %v756 = vmul.f32 %v382, %v724
        %v757 = vmul.f32 %v383, %v724
        %v758 = vmul.f32 %v384, %v724
        %v759 = vmul.f32 %v385, %v724
        %v760 = vmul.f32 %v386, %v724
        %v761 = vmul.f32 %v387, %v724
        %v762 = vmul.f32 %v388, %v724
        %v763 = vmul.f32 %v389, %v724
        %v764 = vmul.f32 %v390, %v724
        %v765 = vmul.f32 %v391, %v724
        %v766 = vmul.f32 %v392, %v724
        %v767 = vmul.f32 %v393, %v724
        %v768 = vmul.f32 %v394, %v724
        %v769 = vmul.f32 %v395, %v724
        %v770 = vmul.f32 %v396, %v724
        %v771 = vmul.f32 %v397, %v724
        %v772 = vmul.f32 %v398, %v724
        %vm821 = vcmask 1045504
        %v822 = vrot.slane %v725, 2
        %v823 = vrot.slane %v726, 2
        %v824 = vsel %vm821, %v822, %v823
        %v825 = vrot.slane %v727, 2
        %v826 = vsel %vm821, %v823, %v825
        %v827 = vrot.slane %v728, 2
        %v828 = vrot.slane %v729, 2
        %v829 = vsel %vm821, %v827, %v828
        %v830 = vrot.slane %v730, 2
        %v831 = vsel %vm821, %v828, %v830
        %v832 = vrot.slane %v731, 2
        %v833 = vrot.slane %v732, 2
        %v834 = vsel %vm821, %v832, %v833
        %v835 = vrot.slane %v733, 2
        %v836 = vsel %vm821, %v833, %v835
        %v837 = vrot.slane %v734, 2
        %v838 = vrot.slane %v735, 2
        %v839 = vsel %vm821, %v837, %v838
        %v840 = vrot.slane %v736, 2
        %v841 = vsel %vm821, %v838, %v840
        %v842 = vrot.slane %v737, 2
        %v843 = vrot.slane %v738, 2
        %v844 = vsel %vm821, %v842, %v843
        %v845 = vrot.slane %v739, 2
        %v846 = vsel %vm821, %v843, %v845
        %v847 = vrot.slane %v740, 2
        %v848 = vrot.slane %v741, 2
        %v849 = vsel %vm821, %v847, %v848
        %v850 = vrot.slane %v742, 2
        %v851 = vsel %vm821, %v848, %v850
        %v852 = vrot.slane %v743, 2
        %v853 = vrot.slane %v744, 2
        %v854 = vsel %vm821, %v852, %v853
        %v855 = vrot.slane %v745, 2
        %v856 = vsel %vm821, %v853, %v855
        %v857 = vrot.slane %v746, 2
        %v858 = vrot.slane %v747, 2
        %v859 = vsel %vm821, %v857, %v858
        %v860 = vrot.slane %v748, 2
        %v861 = vsel %vm821, %v858, %v860
        %v862 = vrot.slane %v749, 2
        %v863 = vrot.slane %v750, 2
        %v864 = vsel %vm821, %v862, %v863
        %v865 = vrot.slane %v751, 2
        %v866 = vsel %vm821, %v863, %v865
        %v867 = vrot.slane %v752, 2
        %v868 = vrot.slane %v753, 2
        %v869 = vsel %vm821, %v867, %v868
        %v870 = vrot.slane %v754, 2
        %v871 = vsel %vm821, %v868, %v870
        %v872 = vrot.slane %v755, 2
        %v873 = vrot.slane %v756, 2
        %v874 = vsel %vm821, %v872, %v873
        %v875 = vrot.slane %v757, 2
        %v876 = vsel %vm821, %v873, %v875
        %v877 = vrot.slane %v758, 2
        %v878 = vrot.slane %v759, 2
        %v879 = vsel %vm821, %v877, %v878
        %v880 = vrot.slane %v760, 2
        %v881 = vsel %vm821, %v878, %v880
        %v882 = vrot.slane %v761, 2
        %v883 = vrot.slane %v762, 2
        %v884 = vsel %vm821, %v882, %v883
        %v885 = vrot.slane %v763, 2
        %v886 = vsel %vm821, %v883, %v885
        %v887 = vrot.slane %v764, 2
        %v888 = vrot.slane %v765, 2
        %v889 = vsel %vm821, %v887, %v888
        %v890 = vrot.slane %v766, 2
        %v891 = vsel %vm821, %v888, %v890
        %v892 = vrot.slane %v767, 2
        %v893 = vrot.slane %v768, 2
        %v894 = vsel %vm821, %v892, %v893
        %v895 = vrot.slane %v769, 2
        %v896 = vsel %vm821, %v893, %v895
        %v897 = vrot.slane %v770, 2
        %v898 = vrot.slane %v771, 2
        %v899 = vsel %vm821, %v897, %v898
        %v900 = vrot.slane %v772, 2
        %v901 = vsel %vm821, %v898, %v900
        %v934 = vadd.f32 %v689, %v824
        %v935 = vadd.f32 %v690, %v826
        %v936 = vadd.f32 %v691, %v829
        %v937 = vadd.f32 %v692, %v831
        %v938 = vadd.f32 %v693, %v834
        %v939 = vadd.f32 %v694, %v836
        %v940 = vadd.f32 %v695, %v839
        %v941 = vadd.f32 %v696, %v841
        %v942 = vadd.f32 %v697, %v844
        %v943 = vadd.f32 %v698, %v846
        %v944 = vadd.f32 %v699, %v849
        %v945 = vadd.f32 %v700, %v851
        %v946 = vadd.f32 %v701, %v854
        %v947 = vadd.f32 %v702, %v856
        %v948 = vadd.f32 %v703, %v859
        %v949 = vadd.f32 %v704, %v861
        %v950 = vadd.f32 %v705, %v864
        %v951 = vadd.f32 %v706, %v866
        %v952 = vadd.f32 %v707, %v869
        %v953 = vadd.f32 %v708, %v871
        %v954 = vadd.f32 %v709, %v874
        %v955 = vadd.f32 %v710, %v876
        %v956 = vadd.f32 %v711, %v879
        %v957 = vadd.f32 %v712, %v881
        %v958 = vadd.f32 %v713, %v884
        %v959 = vadd.f32 %v714, %v886
        %v960 = vadd.f32 %v715, %v889
        %v961 = vadd.f32 %v716, %v891
        %v962 = vadd.f32 %v717, %v894
        %v963 = vadd.f32 %v718, %v896
        %v964 = vadd.f32 %v719, %v899
        %v965 = vadd.f32 %v720, %v901
        %v966 = vlaneseq
        %v967 = vshrl.u32 %v966, 7
        %v968 = vsub.s32 0, %v967
        %v969 = vrot.slane %v406, %v968
        %v970 = vmul.f32 %v354, %v969
        %v971 = vmul.f32 %v355, %v969
        %v972 = vmul.f32 %v357, %v969
        %v973 = vmul.f32 %v358, %v969
        %v974 = vmul.f32 %v360, %v969
        %v975 = vmul.f32 %v361, %v969
        %v976 = vmul.f32 %v363, %v969
        %v977 = vmul.f32 %v364, %v969
        %v978 = vmul.f32 %v366, %v969
        %v979 = vmul.f32 %v367, %v969
        %v980 = vmul.f32 %v369, %v969
        %v981 = vmul.f32 %v370, %v969
        %v982 = vmul.f32 %v372, %v969
        %v983 = vmul.f32 %v373, %v969
        %v984 = vmul.f32 %v375, %v969
        %v985 = vmul.f32 %v376, %v969
        %v986 = vmul.f32 %v378, %v969
        %v987 = vmul.f32 %v379, %v969
        %v988 = vmul.f32 %v381, %v969
        %v989 = vmul.f32 %v382, %v969
        %v990 = vmul.f32 %v384, %v969
        %v991 = vmul.f32 %v385, %v969
        %v992 = vmul.f32 %v387, %v969
        %v993 = vmul.f32 %v388, %v969
        %v994 = vmul.f32 %v390, %v969
        %v995 = vmul.f32 %v391, %v969
        %v996 = vmul.f32 %v393, %v969
        %v997 = vmul.f32 %v394, %v969
        %v998 = vmul.f32 %v396, %v969
        %v999 = vmul.f32 %v397, %v969
        %v1000 = vmul.f32 %v399, %v969
        %v1001 = vmul.f32 %v400, %v969
        %v1002 = vadd.f32 %v934, %v970
        %v1003 = vadd.f32 %v935, %v971
        %v1004 = vadd.f32 %v936, %v972
        %v1005 = vadd.f32 %v937, %v973
        %v1006 = vadd.f32 %v938, %v974
        %v1007 = vadd.f32 %v939, %v975
        %v1008 = vadd.f32 %v940, %v976
        %v1009 = vadd.f32 %v941, %v977
        %v1010 = vadd.f32 %v942, %v978
        %v1011 = vadd.f32 %v943, %v979
        %v1012 = vadd.f32 %v944, %v980
        %v1013 = vadd.f32 %v945, %v981
        %v1014 = vadd.f32 %v946, %v982
        %v1015 = vadd.f32 %v947, %v983
        %v1016 = vadd.f32 %v948, %v984
        %v1017 = vadd.f32 %v949, %v985
        %v1018 = vadd.f32 %v950, %v986
        %v1019 = vadd.f32 %v951, %v987
        %v1020 = vadd.f32 %v952, %v988
        %v1021 = vadd.f32 %v953, %v989
        %v1022 = vadd.f32 %v954, %v990
        %v1023 = vadd.f32 %v955, %v991
        %v1024 = vadd.f32 %v956, %v992
        %v1025 = vadd.f32 %v957, %v993
        %v1026 = vadd.f32 %v958, %v994
        %v1027 = vadd.f32 %v959, %v995
        %v1028 = vadd.f32 %v960, %v996
        %v1029 = vadd.f32 %v961, %v997
        %v1030 = vadd.f32 %v962, %v998
        %v1031 = vadd.f32 %v963, %v999
        %v1032 = vadd.f32 %v964, %v1000
        %v1033 = vadd.f32 %v965, %v1001
        %v1034 = vlaneseq
        %v1035 = vshrl.u32 %v1034, 7
        %v1036 = vsub.s32 1, %v1035
        %v1037 = vrot.slane %v406, %v1036
        %v1038 = vmul.f32 %v354, %v1037
        %v1039 = vmul.f32 %v355, %v1037
        %v1040 = vmul.f32 %v356, %v1037
        %v1041 = vmul.f32 %v357, %v1037
        %v1042 = vmul.f32 %v358, %v1037
        %v1043 = vmul.f32 %v359, %v1037
        %v1044 = vmul.f32 %v360, %v1037
        %v1045 = vmul.f32 %v361, %v1037
        %v1046 = vmul.f32 %v362, %v1037
        %v1047 = vmul.f32 %v363, %v1037
        %v1048 = vmul.f32 %v364, %v1037
        %v1049 = vmul.f32 %v365, %v1037
        %v1050 = vmul.f32 %v366, %v1037
        %v1051 = vmul.f32 %v367, %v1037
        %v1052 = vmul.f32 %v368, %v1037
        %v1053 = vmul.f32 %v369, %v1037
        %v1054 = vmul.f32 %v370, %v1037
        %v1055 = vmul.f32 %v371, %v1037
        %v1056 = vmul.f32 %v372, %v1037
        %v1057 = vmul.f32 %v373, %v1037
        %v1058 = vmul.f32 %v374, %v1037
        %v1059 = vmul.f32 %v375, %v1037
        %v1060 = vmul.f32 %v376, %v1037
        %v1061 = vmul.f32 %v377, %v1037
        %v1062 = vmul.f32 %v378, %v1037
        %v1063 = vmul.f32 %v379, %v1037
        %v1064 = vmul.f32 %v380, %v1037
        %v1065 = vmul.f32 %v381, %v1037
        %v1066 = vmul.f32 %v382, %v1037
        %v1067 = vmul.f32 %v383, %v1037
        %v1068 = vmul.f32 %v384, %v1037
        %v1069 = vmul.f32 %v385, %v1037
        %v1070 = vmul.f32 %v386, %v1037
        %v1071 = vmul.f32 %v387, %v1037
        %v1072 = vmul.f32 %v388, %v1037
        %v1073 = vmul.f32 %v389, %v1037
        %v1074 = vmul.f32 %v390, %v1037
        %v1075 = vmul.f32 %v391, %v1037
        %v1076 = vmul.f32 %v392, %v1037
        %v1077 = vmul.f32 %v393, %v1037
        %v1078 = vmul.f32 %v394, %v1037
        %v1079 = vmul.f32 %v395, %v1037
        %v1080 = vmul.f32 %v396, %v1037
        %v1081 = vmul.f32 %v397, %v1037
        %v1082 = vmul.f32 %v398, %v1037
        %v1083 = vmul.f32 %v399, %v1037
        %v1084 = vmul.f32 %v400, %v1037
        %v1085 = vmul.f32 %v401, %v1037
        %v1134 = vrot.slane %v1038, 1
        %v1135 = vrot.slane %v1039, 1
        %v1136 = vsel %vm576, %v1134, %v1135
        %v1137 = vrot.slane %v1040, 1
        %v1138 = vsel %vm576, %v1135, %v1137
        %v1139 = vrot.slane %v1041, 1
        %v1140 = vrot.slane %v1042, 1
        %v1141 = vsel %vm576, %v1139, %v1140
        %v1142 = vrot.slane %v1043, 1
        %v1143 = vsel %vm576, %v1140, %v1142
        %v1144 = vrot.slane %v1044, 1
        %v1145 = vrot.slane %v1045, 1
        %v1146 = vsel %vm576, %v1144, %v1145
        %v1147 = vrot.slane %v1046, 1
        %v1148 = vsel %vm576, %v1145, %v1147
        %v1149 = vrot.slane %v1047, 1
        %v1150 = vrot.slane %v1048, 1
        %v1151 = vsel %vm576, %v1149, %v1150
        %v1152 = vrot.slane %v1049, 1
        %v1153 = vsel %vm576, %v1150, %v1152
        %v1154 = vrot.slane %v1050, 1
        %v1155 = vrot.slane %v1051, 1
        %v1156 = vsel %vm576, %v1154, %v1155
        %v1157 = vrot.slane %v1052, 1
        %v1158 = vsel %vm576, %v1155, %v1157
        %v1159 = vrot.slane %v1053, 1
        %v1160 = vrot.slane %v1054, 1
        %v1161 = vsel %vm576, %v1159, %v1160
        %v1162 = vrot.slane %v1055, 1
        %v1163 = vsel %vm576, %v1160, %v1162
        %v1164 = vrot.slane %v1056, 1
        %v1165 = vrot.slane %v1057, 1
        %v1166 = vsel %vm576, %v1164, %v1165
        %v1167 = vrot.slane %v1058, 1
        %v1168 = vsel %vm576, %v1165, %v1167
        %v1169 = vrot.slane %v1059, 1
        %v1170 = vrot.slane %v1060, 1
        %v1171 = vsel %vm576, %v1169, %v1170
        %v1172 = vrot.slane %v1061, 1
        %v1173 = vsel %vm576, %v1170, %v1172
        %v1174 = vrot.slane %v1062, 1
        %v1175 = vrot.slane %v1063, 1
        %v1176 = vsel %vm576, %v1174, %v1175
        %v1177 = vrot.slane %v1064, 1
        %v1178 = vsel %vm576, %v1175, %v1177
        %v1179 = vrot.slane %v1065, 1
        %v1180 = vrot.slane %v1066, 1
        %v1181 = vsel %vm576, %v1179, %v1180
        %v1182 = vrot.slane %v1067, 1
        %v1183 = vsel %vm576, %v1180, %v1182
        %v1184 = vrot.slane %v1068, 1
        %v1185 = vrot.slane %v1069, 1
        %v1186 = vsel %vm576, %v1184, %v1185
        %v1187 = vrot.slane %v1070, 1
        %v1188 = vsel %vm576, %v1185, %v1187
        %v1189 = vrot.slane %v1071, 1
        %v1190 = vrot.slane %v1072, 1
        %v1191 = vsel %vm576, %v1189, %v1190
        %v1192 = vrot.slane %v1073, 1
        %v1193 = vsel %vm576, %v1190, %v1192
        %v1194 = vrot.slane %v1074, 1
        %v1195 = vrot.slane %v1075, 1
        %v1196 = vsel %vm576, %v1194, %v1195
        %v1197 = vrot.slane %v1076, 1
        %v1198 = vsel %vm576, %v1195, %v1197
        %v1199 = vrot.slane %v1077, 1
        %v1200 = vrot.slane %v1078, 1
        %v1201 = vsel %vm576, %v1199, %v1200
        %v1202 = vrot.slane %v1079, 1
        %v1203 = vsel %vm576, %v1200, %v1202
        %v1204 = vrot.slane %v1080, 1
        %v1205 = vrot.slane %v1081, 1
        %v1206 = vsel %vm576, %v1204, %v1205
        %v1207 = vrot.slane %v1082, 1
        %v1208 = vsel %vm576, %v1205, %v1207
        %v1209 = vrot.slane %v1083, 1
        %v1210 = vrot.slane %v1084, 1
        %v1211 = vsel %vm576, %v1209, %v1210
        %v1212 = vrot.slane %v1085, 1
        %v1213 = vsel %vm576, %v1210, %v1212
        %v1246 = vadd.f32 %v1002, %v1136
        %v1247 = vadd.f32 %v1003, %v1138
        %v1248 = vadd.f32 %v1004, %v1141
        %v1249 = vadd.f32 %v1005, %v1143
        %v1250 = vadd.f32 %v1006, %v1146
        %v1251 = vadd.f32 %v1007, %v1148
        %v1252 = vadd.f32 %v1008, %v1151
        %v1253 = vadd.f32 %v1009, %v1153
        %v1254 = vadd.f32 %v1010, %v1156
        %v1255 = vadd.f32 %v1011, %v1158
        %v1256 = vadd.f32 %v1012, %v1161
        %v1257 = vadd.f32 %v1013, %v1163
        %v1258 = vadd.f32 %v1014, %v1166
        %v1259 = vadd.f32 %v1015, %v1168
        %v1260 = vadd.f32 %v1016, %v1171
        %v1261 = vadd.f32 %v1017, %v1173
        %v1262 = vadd.f32 %v1018, %v1176
        %v1263 = vadd.f32 %v1019, %v1178
        %v1264 = vadd.f32 %v1020, %v1181
        %v1265 = vadd.f32 %v1021, %v1183
        %v1266 = vadd.f32 %v1022, %v1186
        %v1267 = vadd.f32 %v1023, %v1188
        %v1268 = vadd.f32 %v1024, %v1191
        %v1269 = vadd.f32 %v1025, %v1193
        %v1270 = vadd.f32 %v1026, %v1196
        %v1271 = vadd.f32 %v1027, %v1198
        %v1272 = vadd.f32 %v1028, %v1201
        %v1273 = vadd.f32 %v1029, %v1203
        %v1274 = vadd.f32 %v1030, %v1206
        %v1275 = vadd.f32 %v1031, %v1208
        %v1276 = vadd.f32 %v1032, %v1211
        %v1277 = vadd.f32 %v1033, %v1213
        %v1278 = vlaneseq
        %v1279 = vshrl.u32 %v1278, 7
        %v1280 = vsub.s32 2, %v1279
        %v1281 = vrot.slane %v406, %v1280
        %v1282 = vmul.f32 %v354, %v1281
        %v1283 = vmul.f32 %v355, %v1281
        %v1284 = vmul.f32 %v356, %v1281
        %v1285 = vmul.f32 %v357, %v1281
        %v1286 = vmul.f32 %v358, %v1281
        %v1287 = vmul.f32 %v359, %v1281
        %v1288 = vmul.f32 %v360, %v1281
        %v1289 = vmul.f32 %v361, %v1281
        %v1290 = vmul.f32 %v362, %v1281
        %v1291 = vmul.f32 %v363, %v1281
        %v1292 = vmul.f32 %v364, %v1281
        %v1293 = vmul.f32 %v365, %v1281
        %v1294 = vmul.f32 %v366, %v1281
        %v1295 = vmul.f32 %v367, %v1281
        %v1296 = vmul.f32 %v368, %v1281
        %v1297 = vmul.f32 %v369, %v1281
        %v1298 = vmul.f32 %v370, %v1281
        %v1299 = vmul.f32 %v371, %v1281
        %v1300 = vmul.f32 %v372, %v1281
        %v1301 = vmul.f32 %v373, %v1281
        %v1302 = vmul.f32 %v374, %v1281
        %v1303 = vmul.f32 %v375, %v1281
        %v1304 = vmul.f32 %v376, %v1281
        %v1305 = vmul.f32 %v377, %v1281
        %v1306 = vmul.f32 %v378, %v1281
        %v1307 = vmul.f32 %v379, %v1281
        %v1308 = vmul.f32 %v380, %v1281
        %v1309 = vmul.f32 %v381, %v1281
        %v1310 = vmul.f32 %v382, %v1281
        %v1311 = vmul.f32 %v383, %v1281
        %v1312 = vmul.f32 %v384, %v1281
        %v1313 = vmul.f32 %v385, %v1281
        %v1314 = vmul.f32 %v386, %v1281
        %v1315 = vmul.f32 %v387, %v1281
        %v1316 = vmul.f32 %v388, %v1281
        %v1317 = vmul.f32 %v389, %v1281
        %v1318 = vmul.f32 %v390, %v1281
        %v1319 = vmul.f32 %v391, %v1281
        %v1320 = vmul.f32 %v392, %v1281
        %v1321 = vmul.f32 %v393, %v1281
        %v1322 = vmul.f32 %v394, %v1281
        %v1323 = vmul.f32 %v395, %v1281
        %v1324 = vmul.f32 %v396, %v1281
        %v1325 = vmul.f32 %v397, %v1281
        %v1326 = vmul.f32 %v398, %v1281
        %v1327 = vmul.f32 %v399, %v1281
        %v1328 = vmul.f32 %v400, %v1281
        %v1329 = vmul.f32 %v401, %v1281
        %v1378 = vrot.slane %v1282, 2
        %v1379 = vrot.slane %v1283, 2
        %v1380 = vsel %vm821, %v1378, %v1379
        %v1381 = vrot.slane %v1284, 2
        %v1382 = vsel %vm821, %v1379, %v1381
        %v1383 = vrot.slane %v1285, 2
        %v1384 = vrot.slane %v1286, 2
        %v1385 = vsel %vm821, %v1383, %v1384
        %v1386 = vrot.slane %v1287, 2
        %v1387 = vsel %vm821, %v1384, %v1386
        %v1388 = vrot.slane %v1288, 2
        %v1389 = vrot.slane %v1289, 2
        %v1390 = vsel %vm821, %v1388, %v1389
        %v1391 = vrot.slane %v1290, 2
        %v1392 = vsel %vm821, %v1389, %v1391
        %v1393 = vrot.slane %v1291, 2
        %v1394 = vrot.slane %v1292, 2
        %v1395 = vsel %vm821, %v1393, %v1394
        %v1396 = vrot.slane %v1293, 2
        %v1397 = vsel %vm821, %v1394, %v1396
        %v1398 = vrot.slane %v1294, 2
        %v1399 = vrot.slane %v1295, 2
        %v1400 = vsel %vm821, %v1398, %v1399
        %v1401 = vrot.slane %v1296, 2
        %v1402 = vsel %vm821, %v1399, %v1401
        %v1403 = vrot.slane %v1297, 2
        %v1404 = vrot.slane %v1298, 2
        %v1405 = vsel %vm821, %v1403, %v1404
        %v1406 = vrot.slane %v1299, 2
        %v1407 = vsel %vm821, %v1404, %v1406
        %v1408 = vrot.slane %v1300, 2
        %v1409 = vrot.slane %v1301, 2
        %v1410 = vsel %vm821, %v1408, %v1409
        %v1411 = vrot.slane %v1302, 2
        %v1412 = vsel %vm821, %v1409, %v1411
        %v1413 = vrot.slane %v1303, 2
        %v1414 = vrot.slane %v1304, 2
        %v1415 = vsel %vm821, %v1413, %v1414
        %v1416 = vrot.slane %v1305, 2
        %v1417 = vsel %vm821, %v1414, %v1416
        %v1418 = vrot.slane %v1306, 2
        %v1419 = vrot.slane %v1307, 2
        %v1420 = vsel %vm821, %v1418, %v1419
        %v1421 = vrot.slane %v1308, 2
        %v1422 = vsel %vm821, %v1419, %v1421
        %v1423 = vrot.slane %v1309, 2
        %v1424 = vrot.slane %v1310, 2
        %v1425 = vsel %vm821, %v1423, %v1424
        %v1426 = vrot.slane %v1311, 2
        %v1427 = vsel %vm821, %v1424, %v1426
        %v1428 = vrot.slane %v1312, 2
        %v1429 = vrot.slane %v1313, 2
        %v1430 = vsel %vm821, %v1428, %v1429
        %v1431 = vrot.slane %v1314, 2
        %v1432 = vsel %vm821, %v1429, %v1431
        %v1433 = vrot.slane %v1315, 2
        %v1434 = vrot.slane %v1316, 2
        %v1435 = vsel %vm821, %v1433, %v1434
        %v1436 = vrot.slane %v1317, 2
        %v1437 = vsel %vm821, %v1434, %v1436
        %v1438 = vrot.slane %v1318, 2
        %v1439 = vrot.slane %v1319, 2
        %v1440 = vsel %vm821, %v1438, %v1439
        %v1441 = vrot.slane %v1320, 2
        %v1442 = vsel %vm821, %v1439, %v1441
        %v1443 = vrot.slane %v1321, 2
        %v1444 = vrot.slane %v1322, 2
        %v1445 = vsel %vm821, %v1443, %v1444
        %v1446 = vrot.slane %v1323, 2
        %v1447 = vsel %vm821, %v1444, %v1446
        %v1448 = vrot.slane %v1324, 2
        %v1449 = vrot.slane %v1325, 2
        %v1450 = vsel %vm821, %v1448, %v1449
        %v1451 = vrot.slane %v1326, 2
        %v1452 = vsel %vm821, %v1449, %v1451
        %v1453 = vrot.slane %v1327, 2
        %v1454 = vrot.slane %v1328, 2
        %v1455 = vsel %vm821, %v1453, %v1454
        %v1456 = vrot.slane %v1329, 2
        %v1457 = vsel %vm821, %v1454, %v1456
        %v1490 = vadd.f32 %v1246, %v1380
        %v1491 = vadd.f32 %v1247, %v1382
        %v1492 = vadd.f32 %v1248, %v1385
        %v1493 = vadd.f32 %v1249, %v1387
        %v1494 = vadd.f32 %v1250, %v1390
        %v1495 = vadd.f32 %v1251, %v1392
        %v1496 = vadd.f32 %v1252, %v1395
        %v1497 = vadd.f32 %v1253, %v1397
        %v1498 = vadd.f32 %v1254, %v1400
        %v1499 = vadd.f32 %v1255, %v1402
        %v1500 = vadd.f32 %v1256, %v1405
        %v1501 = vadd.f32 %v1257, %v1407
        %v1502 = vadd.f32 %v1258, %v1410
        %v1503 = vadd.f32 %v1259, %v1412
        %v1504 = vadd.f32 %v1260, %v1415
        %v1505 = vadd.f32 %v1261, %v1417
        %v1506 = vadd.f32 %v1262, %v1420
        %v1507 = vadd.f32 %v1263, %v1422
        %v1508 = vadd.f32 %v1264, %v1425
        %v1509 = vadd.f32 %v1265, %v1427
        %v1510 = vadd.f32 %v1266, %v1430
        %v1511 = vadd.f32 %v1267, %v1432
        %v1512 = vadd.f32 %v1268, %v1435
        %v1513 = vadd.f32 %v1269, %v1437
        %v1514 = vadd.f32 %v1270, %v1440
        %v1515 = vadd.f32 %v1271, %v1442
        %v1516 = vadd.f32 %v1272, %v1445
        %v1517 = vadd.f32 %v1273, %v1447
        %v1518 = vadd.f32 %v1274, %v1450
        %v1519 = vadd.f32 %v1275, %v1452
        %v1520 = vadd.f32 %v1276, %v1455
        %v1521 = vadd.f32 %v1277, %v1457
        %v1522 = vlaneseq
        %v1523 = vshrl.u32 %v1522, 7
        %v1524 = vsub.s32 0, %v1523
        %v1525 = vrot.slane %v407, %v1524
        %v1526 = vmul.f32 %v357, %v1525
        %v1527 = vmul.f32 %v358, %v1525
        %v1528 = vmul.f32 %v360, %v1525
        %v1529 = vmul.f32 %v361, %v1525
        %v1530 = vmul.f32 %v363, %v1525
        %v1531 = vmul.f32 %v364, %v1525
        %v1532 = vmul.f32 %v366, %v1525
        %v1533 = vmul.f32 %v367, %v1525
        %v1534 = vmul.f32 %v369, %v1525
        %v1535 = vmul.f32 %v370, %v1525
        %v1536 = vmul.f32 %v372, %v1525
        %v1537 = vmul.f32 %v373, %v1525
        %v1538 = vmul.f32 %v375, %v1525
        %v1539 = vmul.f32 %v376, %v1525
        %v1540 = vmul.f32 %v378, %v1525
        %v1541 = vmul.f32 %v379, %v1525
        %v1542 = vmul.f32 %v381, %v1525
        %v1543 = vmul.f32 %v382, %v1525
        %v1544 = vmul.f32 %v384, %v1525
        %v1545 = vmul.f32 %v385, %v1525
        %v1546 = vmul.f32 %v387, %v1525
        %v1547 = vmul.f32 %v388, %v1525
        %v1548 = vmul.f32 %v390, %v1525
        %v1549 = vmul.f32 %v391, %v1525
        %v1550 = vmul.f32 %v393, %v1525
        %v1551 = vmul.f32 %v394, %v1525
        %v1552 = vmul.f32 %v396, %v1525
        %v1553 = vmul.f32 %v397, %v1525
        %v1554 = vmul.f32 %v399, %v1525
        %v1555 = vmul.f32 %v400, %v1525
        %v1556 = vmul.f32 %v402, %v1525
        %v1557 = vmul.f32 %v403, %v1525
        %v1558 = vadd.f32 %v1490, %v1526
        %v1559 = vadd.f32 %v1491, %v1527
        %v1560 = vadd.f32 %v1492, %v1528
        %v1561 = vadd.f32 %v1493, %v1529
        %v1562 = vadd.f32 %v1494, %v1530
        %v1563 = vadd.f32 %v1495, %v1531
        %v1564 = vadd.f32 %v1496, %v1532
        %v1565 = vadd.f32 %v1497, %v1533
        %v1566 = vadd.f32 %v1498, %v1534
        %v1567 = vadd.f32 %v1499, %v1535
        %v1568 = vadd.f32 %v1500, %v1536
        %v1569 = vadd.f32 %v1501, %v1537
        %v1570 = vadd.f32 %v1502, %v1538
        %v1571 = vadd.f32 %v1503, %v1539
        %v1572 = vadd.f32 %v1504, %v1540
        %v1573 = vadd.f32 %v1505, %v1541
        %v1574 = vadd.f32 %v1506, %v1542
        %v1575 = vadd.f32 %v1507, %v1543
        %v1576 = vadd.f32 %v1508, %v1544
        %v1577 = vadd.f32 %v1509, %v1545
        %v1578 = vadd.f32 %v1510, %v1546
        %v1579 = vadd.f32 %v1511, %v1547
        %v1580 = vadd.f32 %v1512, %v1548
        %v1581 = vadd.f32 %v1513, %v1549
        %v1582 = vadd.f32 %v1514, %v1550
        %v1583 = vadd.f32 %v1515, %v1551
        %v1584 = vadd.f32 %v1516, %v1552
        %v1585 = vadd.f32 %v1517, %v1553
        %v1586 = vadd.f32 %v1518, %v1554
        %v1587 = vadd.f32 %v1519, %v1555
        %v1588 = vadd.f32 %v1520, %v1556
        %v1589 = vadd.f32 %v1521, %v1557
        %v1590 = vlaneseq
        %v1591 = vshrl.u32 %v1590, 7
        %v1592 = vsub.s32 1, %v1591
        %v1593 = vrot.slane %v407, %v1592
        %v1594 = vmul.f32 %v357, %v1593
        %v1595 = vmul.f32 %v358, %v1593
        %v1596 = vmul.f32 %v359, %v1593
        %v1597 = vmul.f32 %v360, %v1593
        %v1598 = vmul.f32 %v361, %v1593
        %v1599 = vmul.f32 %v362, %v1593
        %v1600 = vmul.f32 %v363, %v1593
        %v1601 = vmul.f32 %v364, %v1593
        %v1602 = vmul.f32 %v365, %v1593
        %v1603 = vmul.f32 %v366, %v1593
        %v1604 = vmul.f32 %v367, %v1593
        %v1605 = vmul.f32 %v368, %v1593
        %v1606 = vmul.f32 %v369, %v1593
        %v1607 = vmul.f32 %v370, %v1593
        %v1608 = vmul.f32 %v371, %v1593
        %v1609 = vmul.f32 %v372, %v1593
        %v1610 = vmul.f32 %v373, %v1593
        %v1611 = vmul.f32 %v374, %v1593
        %v1612 = vmul.f32 %v375, %v1593
        %v1613 = vmul.f32 %v376, %v1593
        %v1614 = vmul.f32 %v377, %v1593
        %v1615 = vmul.f32 %v378, %v1593
        %v1616 = vmul.f32 %v379, %v1593
        %v1617 = vmul.f32 %v380, %v1593
        %v1618 = vmul.f32 %v381, %v1593
        %v1619 = vmul.f32 %v382, %v1593
        %v1620 = vmul.f32 %v383, %v1593
        %v1621 = vmul.f32 %v384, %v1593
        %v1622 = vmul.f32 %v385, %v1593
        %v1623 = vmul.f32 %v386, %v1593
        %v1624 = vmul.f32 %v387, %v1593
        %v1625 = vmul.f32 %v388, %v1593
        %v1626 = vmul.f32 %v389, %v1593
        %v1627 = vmul.f32 %v390, %v1593
        %v1628 = vmul.f32 %v391, %v1593
        %v1629 = vmul.f32 %v392, %v1593
        %v1630 = vmul.f32 %v393, %v1593
        %v1631 = vmul.f32 %v394, %v1593
        %v1632 = vmul.f32 %v395, %v1593
        %v1633 = vmul.f32 %v396, %v1593
        %v1634 = vmul.f32 %v397, %v1593
        %v1635 = vmul.f32 %v398, %v1593
        %v1636 = vmul.f32 %v399, %v1593
        %v1637 = vmul.f32 %v400, %v1593
        %v1638 = vmul.f32 %v401, %v1593
        %v1639 = vmul.f32 %v402, %v1593
        %v1640 = vmul.f32 %v403, %v1593
        %v1641 = vmul.f32 %v404, %v1593
        %v1690 = vrot.slane %v1594, 1
        %v1691 = vrot.slane %v1595, 1
        %v1692 = vsel %vm576, %v1690, %v1691
        %v1693 = vrot.slane %v1596, 1
        %v1694 = vsel %vm576, %v1691, %v1693
        %v1695 = vrot.slane %v1597, 1
        %v1696 = vrot.slane %v1598, 1
        %v1697 = vsel %vm576, %v1695, %v1696
        %v1698 = vrot.slane %v1599, 1
        %v1699 = vsel %vm576, %v1696, %v1698
        %v1700 = vrot.slane %v1600, 1
        %v1701 = vrot.slane %v1601, 1
        %v1702 = vsel %vm576, %v1700, %v1701
        %v1703 = vrot.slane %v1602, 1
        %v1704 = vsel %vm576, %v1701, %v1703
        %v1705 = vrot.slane %v1603, 1
        %v1706 = vrot.slane %v1604, 1
        %v1707 = vsel %vm576, %v1705, %v1706
        %v1708 = vrot.slane %v1605, 1
        %v1709 = vsel %vm576, %v1706, %v1708
        %v1710 = vrot.slane %v1606, 1
        %v1711 = vrot.slane %v1607, 1
        %v1712 = vsel %vm576, %v1710, %v1711
        %v1713 = vrot.slane %v1608, 1
        %v1714 = vsel %vm576, %v1711, %v1713
        %v1715 = vrot.slane %v1609, 1
        %v1716 = vrot.slane %v1610, 1
        %v1717 = vsel %vm576, %v1715, %v1716
        %v1718 = vrot.slane %v1611, 1
        %v1719 = vsel %vm576, %v1716, %v1718
        %v1720 = vrot.slane %v1612, 1
        %v1721 = vrot.slane %v1613, 1
        %v1722 = vsel %vm576, %v1720, %v1721
        %v1723 = vrot.slane %v1614, 1
        %v1724 = vsel %vm576, %v1721, %v1723
        %v1725 = vrot.slane %v1615, 1
        %v1726 = vrot.slane %v1616, 1
        %v1727 = vsel %vm576, %v1725, %v1726
        %v1728 = vrot.slane %v1617, 1
        %v1729 = vsel %vm576, %v1726, %v1728
        %v1730 = vrot.slane %v1618, 1
        %v1731 = vrot.slane %v1619, 1
        %v1732 = vsel %vm576, %v1730, %v1731
        %v1733 = vrot.slane %v1620, 1
        %v1734 = vsel %vm576, %v1731, %v1733
        %v1735 = vrot.slane %v1621, 1
        %v1736 = vrot.slane %v1622, 1
        %v1737 = vsel %vm576, %v1735, %v1736
        %v1738 = vrot.slane %v1623, 1
        %v1739 = vsel %vm576, %v1736, %v1738
        %v1740 = vrot.slane %v1624, 1
        %v1741 = vrot.slane %v1625, 1
        %v1742 = vsel %vm576, %v1740, %v1741
        %v1743 = vrot.slane %v1626, 1
        %v1744 = vsel %vm576, %v1741, %v1743
        %v1745 = vrot.slane %v1627, 1
        %v1746 = vrot.slane %v1628, 1
        %v1747 = vsel %vm576, %v1745, %v1746
        %v1748 = vrot.slane %v1629, 1
        %v1749 = vsel %vm576, %v1746, %v1748
        %v1750 = vrot.slane %v1630, 1
        %v1751 = vrot.slane %v1631, 1
        %v1752 = vsel %vm576, %v1750, %v1751
        %v1753 = vrot.slane %v1632, 1
        %v1754 = vsel %vm576, %v1751, %v1753
        %v1755 = vrot.slane %v1633, 1
        %v1756 = vrot.slane %v1634, 1
        %v1757 = vsel %vm576, %v1755, %v1756
        %v1758 = vrot.slane %v1635, 1
        %v1759 = vsel %vm576, %v1756, %v1758
        %v1760 = vrot.slane %v1636, 1
        %v1761 = vrot.slane %v1637, 1
        %v1762 = vsel %vm576, %v1760, %v1761
        %v1763 = vrot.slane %v1638, 1
        %v1764 = vsel %vm576, %v1761, %v1763
        %v1765 = vrot.slane %v1639, 1
        %v1766 = vrot.slane %v1640, 1
        %v1767 = vsel %vm576, %v1765, %v1766
        %v1768 = vrot.slane %v1641, 1
        %v1769 = vsel %vm576, %v1766, %v1768
        %v1802 = vadd.f32 %v1558, %v1692
        %v1803 = vadd.f32 %v1559, %v1694
        %v1804 = vadd.f32 %v1560, %v1697
        %v1805 = vadd.f32 %v1561, %v1699
        %v1806 = vadd.f32 %v1562, %v1702
        %v1807 = vadd.f32 %v1563, %v1704
        %v1808 = vadd.f32 %v1564, %v1707
        %v1809 = vadd.f32 %v1565, %v1709
        %v1810 = vadd.f32 %v1566, %v1712
        %v1811 = vadd.f32 %v1567, %v1714
        %v1812 = vadd.f32 %v1568, %v1717
        %v1813 = vadd.f32 %v1569, %v1719
        %v1814 = vadd.f32 %v1570, %v1722
        %v1815 = vadd.f32 %v1571, %v1724
        %v1816 = vadd.f32 %v1572, %v1727
        %v1817 = vadd.f32 %v1573, %v1729
        %v1818 = vadd.f32 %v1574, %v1732
        %v1819 = vadd.f32 %v1575, %v1734
        %v1820 = vadd.f32 %v1576, %v1737
        %v1821 = vadd.f32 %v1577, %v1739
        %v1822 = vadd.f32 %v1578, %v1742
        %v1823 = vadd.f32 %v1579, %v1744
        %v1824 = vadd.f32 %v1580, %v1747
        %v1825 = vadd.f32 %v1581, %v1749
        %v1826 = vadd.f32 %v1582, %v1752
        %v1827 = vadd.f32 %v1583, %v1754
        %v1828 = vadd.f32 %v1584, %v1757
        %v1829 = vadd.f32 %v1585, %v1759
        %v1830 = vadd.f32 %v1586, %v1762
        %v1831 = vadd.f32 %v1587, %v1764
        %v1832 = vadd.f32 %v1588, %v1767
        %v1833 = vadd.f32 %v1589, %v1769
        %v1834 = vlaneseq
        %v1835 = vshrl.u32 %v1834, 7
        %v1836 = vsub.s32 2, %v1835
        %v1837 = vrot.slane %v407, %v1836
        %v1838 = vmul.f32 %v357, %v1837
        %v1839 = vmul.f32 %v358, %v1837
        %v1840 = vmul.f32 %v359, %v1837
        %v1841 = vmul.f32 %v360, %v1837
        %v1842 = vmul.f32 %v361, %v1837
        %v1843 = vmul.f32 %v362, %v1837
        %v1844 = vmul.f32 %v363, %v1837
        %v1845 = vmul.f32 %v364, %v1837
        %v1846 = vmul.f32 %v365, %v1837
        %v1847 = vmul.f32 %v366, %v1837
        %v1848 = vmul.f32 %v367, %v1837
        %v1849 = vmul.f32 %v368, %v1837
        %v1850 = vmul.f32 %v369, %v1837
        %v1851 = vmul.f32 %v370, %v1837
        %v1852 = vmul.f32 %v371, %v1837
        %v1853 = vmul.f32 %v372, %v1837
        %v1854 = vmul.f32 %v373, %v1837
        %v1855 = vmul.f32 %v374, %v1837
        %v1856 = vmul.f32 %v375, %v1837
        %v1857 = vmul.f32 %v376, %v1837
        %v1858 = vmul.f32 %v377, %v1837
        %v1859 = vmul.f32 %v378, %v1837
        %v1860 = vmul.f32 %v379, %v1837
        %v1861 = vmul.f32 %v380, %v1837
        %v1862 = vmul.f32 %v381, %v1837
        %v1863 = vmul.f32 %v382, %v1837
        %v1864 = vmul.f32 %v383, %v1837
        %v1865 = vmul.f32 %v384, %v1837
        %v1866 = vmul.f32 %v385, %v1837
        %v1867 = vmul.f32 %v386, %v1837
        %v1868 = vmul.f32 %v387, %v1837
        %v1869 = vmul.f32 %v388, %v1837
        %v1870 = vmul.f32 %v389, %v1837
        %v1871 = vmul.f32 %v390, %v1837
        %v1872 = vmul.f32 %v391, %v1837
        %v1873 = vmul.f32 %v392, %v1837
        %v1874 = vmul.f32 %v393, %v1837
        %v1875 = vmul.f32 %v394, %v1837
        %v1876 = vmul.f32 %v395, %v1837
        %v1877 = vmul.f32 %v396, %v1837
        %v1878 = vmul.f32 %v397, %v1837
        %v1879 = vmul.f32 %v398, %v1837
        %v1880 = vmul.f32 %v399, %v1837
        %v1881 = vmul.f32 %v400, %v1837
        %v1882 = vmul.f32 %v401, %v1837
        %v1883 = vmul.f32 %v402, %v1837
        %v1884 = vmul.f32 %v403, %v1837
        %v1885 = vmul.f32 %v404, %v1837
        %v1934 = vrot.slane %v1838, 2
        %v1935 = vrot.slane %v1839, 2
        %v1936 = vsel %vm821, %v1934, %v1935
        %v1937 = vrot.slane %v1840, 2
        %v1938 = vsel %vm821, %v1935, %v1937
        %v1939 = vrot.slane %v1841, 2
        %v1940 = vrot.slane %v1842, 2
        %v1941 = vsel %vm821, %v1939, %v1940
        %v1942 = vrot.slane %v1843, 2
        %v1943 = vsel %vm821, %v1940, %v1942
        %v1944 = vrot.slane %v1844, 2
        %v1945 = vrot.slane %v1845, 2
        %v1946 = vsel %vm821, %v1944, %v1945
        %v1947 = vrot.slane %v1846, 2
        %v1948 = vsel %vm821, %v1945, %v1947
        %v1949 = vrot.slane %v1847, 2
        %v1950 = vrot.slane %v1848, 2
        %v1951 = vsel %vm821, %v1949, %v1950
        %v1952 = vrot.slane %v1849, 2
        %v1953 = vsel %vm821, %v1950, %v1952
        %v1954 = vrot.slane %v1850, 2
        %v1955 = vrot.slane %v1851, 2
        %v1956 = vsel %vm821, %v1954, %v1955
        %v1957 = vrot.slane %v1852, 2
        %v1958 = vsel %vm821, %v1955, %v1957
        %v1959 = vrot.slane %v1853, 2
        %v1960 = vrot.slane %v1854, 2
        %v1961 = vsel %vm821, %v1959, %v1960
        %v1962 = vrot.slane %v1855, 2
        %v1963 = vsel %vm821, %v1960, %v1962
        %v1964 = vrot.slane %v1856, 2
        %v1965 = vrot.slane %v1857, 2
        %v1966 = vsel %vm821, %v1964, %v1965
        %v1967 = vrot.slane %v1858, 2
        %v1968 = vsel %vm821, %v1965, %v1967
        %v1969 = vrot.slane %v1859, 2
        %v1970 = vrot.slane %v1860, 2
        %v1971 = vsel %vm821, %v1969, %v1970
        %v1972 = vrot.slane %v1861, 2
        %v1973 = vsel %vm821, %v1970, %v1972
        %v1974 = vrot.slane %v1862, 2
        %v1975 = vrot.slane %v1863, 2
        %v1976 = vsel %vm821, %v1974, %v1975
        %v1977 = vrot.slane %v1864, 2
        %v1978 = vsel %vm821, %v1975, %v1977
        %v1979 = vrot.slane %v1865, 2
        %v1980 = vrot.slane %v1866, 2
        %v1981 = vsel %vm821, %v1979, %v1980
        %v1982 = vrot.slane %v1867, 2
        %v1983 = vsel %vm821, %v1980, %v1982
        %v1984 = vrot.slane %v1868, 2
        %v1985 = vrot.slane %v1869, 2
        %v1986 = vsel %vm821, %v1984, %v1985
        %v1987 = vrot.slane %v1870, 2
        %v1988 = vsel %vm821, %v1985, %v1987
        %v1989 = vrot.slane %v1871, 2
        %v1990 = vrot.slane %v1872, 2
        %v1991 = vsel %vm821, %v1989, %v1990
        %v1992 = vrot.slane %v1873, 2
        %v1993 = vsel %vm821, %v1990, %v1992
        %v1994 = vrot.slane %v1874, 2
        %v1995 = vrot.slane %v1875, 2
        %v1996 = vsel %vm821, %v1994, %v1995
        %v1997 = vrot.slane %v1876, 2
        %v1998 = vsel %vm821, %v1995, %v1997
        %v1999 = vrot.slane %v1877, 2
        %v2000 = vrot.slane %v1878, 2
        %v2001 = vsel %vm821, %v1999, %v2000
        %v2002 = vrot.slane %v1879, 2
        %v2003 = vsel %vm821, %v2000, %v2002
        %v2004 = vrot.slane %v1880, 2
        %v2005 = vrot.slane %v1881, 2
        %v2006 = vsel %vm821, %v2004, %v2005
        %v2007 = vrot.slane %v1882, 2
        %v2008 = vsel %vm821, %v2005, %v2007
        %v2009 = vrot.slane %v1883, 2
        %v2010 = vrot.slane %v1884, 2
        %v2011 = vsel %vm821, %v2009, %v2010
        %v2012 = vrot.slane %v1885, 2
        %v2013 = vsel %vm821, %v2010, %v2012
        %v2046 = vadd.f32 %v1802, %v1936
        %v2047 = vadd.f32 %v1803, %v1938
        %v2048 = vadd.f32 %v1804, %v1941
        %v2049 = vadd.f32 %v1805, %v1943
        %v2050 = vadd.f32 %v1806, %v1946
        %v2051 = vadd.f32 %v1807, %v1948
        %v2052 = vadd.f32 %v1808, %v1951
        %v2053 = vadd.f32 %v1809, %v1953
        %v2054 = vadd.f32 %v1810, %v1956
        %v2055 = vadd.f32 %v1811, %v1958
        %v2056 = vadd.f32 %v1812, %v1961
        %v2057 = vadd.f32 %v1813, %v1963
        %v2058 = vadd.f32 %v1814, %v1966
        %v2059 = vadd.f32 %v1815, %v1968
        %v2060 = vadd.f32 %v1816, %v1971
        %v2061 = vadd.f32 %v1817, %v1973
        %v2062 = vadd.f32 %v1818, %v1976
        %v2063 = vadd.f32 %v1819, %v1978
        %v2064 = vadd.f32 %v1820, %v1981
        %v2065 = vadd.f32 %v1821, %v1983
        %v2066 = vadd.f32 %v1822, %v1986
        %v2067 = vadd.f32 %v1823, %v1988
        %v2068 = vadd.f32 %v1824, %v1991
        %v2069 = vadd.f32 %v1825, %v1993
        %v2070 = vadd.f32 %v1826, %v1996
        %v2071 = vadd.f32 %v1827, %v1998
        %v2072 = vadd.f32 %v1828, %v2001
        %v2073 = vadd.f32 %v1829, %v2003
        %v2074 = vadd.f32 %v1830, %v2006
        %v2075 = vadd.f32 %v1831, %v2008
        %v2076 = vadd.f32 %v1832, %v2011
        %v2077 = vadd.f32 %v1833, %v2013
        %v2078 = vmax.f32 %v2046, 0.0
        %v2079 = vmax.f32 %v2047, 0.0
        %v2080 = vmax.f32 %v2048, 0.0
        %v2081 = vmax.f32 %v2049, 0.0
        %v2082 = vmax.f32 %v2050, 0.0
        %v2083 = vmax.f32 %v2051, 0.0
        %v2084 = vmax.f32 %v2052, 0.0
        %v2085 = vmax.f32 %v2053, 0.0
        %v2086 = vmax.f32 %v2054, 0.0
        %v2087 = vmax.f32 %v2055, 0.0
        %v2088 = vmax.f32 %v2056, 0.0
        %v2089 = vmax.f32 %v2057, 0.0
        %v2090 = vmax.f32 %v2058, 0.0
        %v2091 = vmax.f32 %v2059, 0.0
        %v2092 = vmax.f32 %v2060, 0.0
        %v2093 = vmax.f32 %v2061, 0.0
        %v2094 = vmax.f32 %v2062, 0.0
        %v2095 = vmax.f32 %v2063, 0.0
        %v2096 = vmax.f32 %v2064, 0.0
        %v2097 = vmax.f32 %v2065, 0.0
        %v2098 = vmax.f32 %v2066, 0.0
        %v2099 = vmax.f32 %v2067, 0.0
        %v2100 = vmax.f32 %v2068, 0.0
        %v2101 = vmax.f32 %v2069, 0.0
        %v2102 = vmax.f32 %v2070, 0.0
        %v2103 = vmax.f32 %v2071, 0.0
        %v2104 = vmax.f32 %v2072, 0.0
        %v2105 = vmax.f32 %v2073, 0.0
        %v2106 = vmax.f32 %v2074, 0.0
        %v2107 = vmax.f32 %v2075, 0.0
        %v2108 = vmax.f32 %v2076, 0.0
        %v2109 = vmax.f32 %v2077, 0.0
        %v2110 = vld [vmem:[%s2] sm:$0xff]
        %v2111 = vld [vmem:[%s2 + $0x8] sm:$0xff]
        %v2112 = vld [vmem:[%s3] sm:$0xff]
        %v2113 = vld [vmem:[%s3 + $0x8] sm:$0xff]
        %2115 = vset.pattern.permute.xlu0 0
        %2116 = vperm.xlu0 %2115, %v2112
        %v2117 = vpop.permute.xlu0 %2116
        %2120 = vset.pattern.permute.xlu0 0
        %2121 = vperm.xlu0 %2120, %v2113
        %v2122 = vpop.permute.xlu0 %2121
        %v2125 = vsel %vm262, %v2110, 0
        %v2128 = vsel %vm262, %v2111, 0
        %v2131 = vsel %vm262, %v2078, 0
        %v2134 = vsel %vm262, %v2079, 0
        %v2137 = vsel %vm262, %v2080, 0
        %v2140 = vsel %vm262, %v2081, 0
        %v2143 = vsel %vm262, %v2082, 0
        %v2146 = vsel %vm262, %v2083, 0
        %v2149 = vsel %vm262, %v2084, 0
        %v2152 = vsel %vm262, %v2085, 0
        %v2155 = vsel %vm262, %v2086, 0
        %v2158 = vsel %vm262, %v2087, 0
        %v2161 = vsel %vm262, %v2088, 0
        %v2164 = vsel %vm262, %v2089, 0
        %v2167 = vsel %vm262, %v2090, 0
        %v2170 = vsel %vm262, %v2091, 0
        %v2173 = vsel %vm262, %v2092, 0
        %v2176 = vsel %vm262, %v2093, 0
        %v2179 = vsel %vm262, %v2094, 0
        %v2182 = vsel %vm262, %v2095, 0
        %v2185 = vsel %vm262, %v2096, 0
        %v2188 = vsel %vm262, %v2097, 0
        %v2191 = vsel %vm262, %v2098, 0
        %v2194 = vsel %vm262, %v2099, 0
        %v2197 = vsel %vm262, %v2100, 0
        %v2200 = vsel %vm262, %v2101, 0
        %v2203 = vsel %vm262, %v2102, 0
        %v2206 = vsel %vm262, %v2103, 0
        %v2209 = vsel %vm262, %v2104, 0
        %v2212 = vsel %vm262, %v2105, 0
        %v2215 = vsel %vm262, %v2106, 0
        %v2218 = vsel %vm262, %v2107, 0
        %v2221 = vsel %vm262, %v2108, 0
        %v2224 = vsel %vm262, %v2109, 0
        %2226 = vmatprep.subr.mxu0 0.0
        %2227 = vmatpush1.xpose.msra.mxu0 %v2131
        %2228 = vmatprep.subr.mxu0 0.0
        %2229 = vmatpush1.xpose.msra.mxu0 %v2134
        %2230 = vmatprep.subr.mxu0 0.0
        %2231 = vmatpush1.xpose.msra.mxu0 %v2137
        %2232 = vmatprep.subr.mxu0 0.0
        %2233 = vmatpush1.xpose.msra.mxu0 %v2140
        %2234 = vmatprep.subr.mxu0 0.0
        %2235 = vmatpush1.xpose.msra.mxu0 %v2143
        %2236 = vmatprep.subr.mxu0 0.0
        %2237 = vmatpush1.xpose.msra.mxu0 %v2146
        %2238 = vmatprep.subr.mxu0 0.0
        %2239 = vmatpush1.xpose.msra.mxu0 %v2149
        %2240 = vmatprep.subr.mxu0 0.0
        %2241 = vmatpush1.xpose.msra.mxu0 %v2152
        %2242 = vmatprep.subr.mxu0 0.0
        %2243 = vmatpush1.xpose.msra.mxu0 %v2155
        %2244 = vmatprep.subr.mxu0 0.0
        %2245 = vmatpush1.xpose.msra.mxu0 %v2158
        %2246 = vmatprep.subr.mxu0 0.0
        %2247 = vmatpush1.xpose.msra.mxu0 %v2161
        %2248 = vmatprep.subr.mxu0 0.0
        %2249 = vmatpush1.xpose.msra.mxu0 %v2164
        %2250 = vmatprep.subr.mxu0 0.0
        %2251 = vmatpush1.xpose.msra.mxu0 %v2167
        %2252 = vmatprep.subr.mxu0 0.0
        %2253 = vmatpush1.xpose.msra.mxu0 %v2170
        %2254 = vmatprep.subr.mxu0 0.0
        %2255 = vmatpush1.xpose.msra.mxu0 %v2173
        %2256 = vmatprep.subr.mxu0 0.0
        %2257 = vmatpush1.xpose.msra.mxu0 %v2176
        %2258 = vmatprep.subr.mxu0 0.0
        %2259 = vmatpush1.xpose.msra.mxu0 %v2179
        %2260 = vmatprep.subr.mxu0 0.0
        %2261 = vmatpush1.xpose.msra.mxu0 %v2182
        %2262 = vmatprep.subr.mxu0 0.0
        %2263 = vmatpush1.xpose.msra.mxu0 %v2185
        %2264 = vmatprep.subr.mxu0 0.0
        %2265 = vmatpush1.xpose.msra.mxu0 %v2188
        %2266 = vmatprep.subr.mxu0 0.0
        %2267 = vmatpush1.xpose.msra.mxu0 %v2191
        %2268 = vmatprep.subr.mxu0 0.0
        %2269 = vmatpush1.xpose.msra.mxu0 %v2194
        %2270 = vmatprep.subr.mxu0 0.0
        %2271 = vmatpush1.xpose.msra.mxu0 %v2197
        %2272 = vmatprep.subr.mxu0 0.0
        %2273 = vmatpush1.xpose.msra.mxu0 %v2200
        %2274 = vmatprep.subr.mxu0 0.0
        %2275 = vmatpush1.xpose.msra.mxu0 %v2203
        %2276 = vmatprep.subr.mxu0 0.0
        %2277 = vmatpush1.xpose.msra.mxu0 %v2206
        %2278 = vmatprep.subr.mxu0 0.0
        %2279 = vmatpush1.xpose.msra.mxu0 %v2209
        %2280 = vmatprep.subr.mxu0 0.0
        %2281 = vmatpush1.xpose.msra.mxu0 %v2212
        %2282 = vmatprep.subr.mxu0 0.0
        %2283 = vmatpush1.xpose.msra.mxu0 %v2215
        %2284 = vmatprep.subr.mxu0 0.0
        %2285 = vmatpush1.xpose.msra.mxu0 %v2218
        %2286 = vmatprep.subr.mxu0 0.0
        %2287 = vmatpush1.xpose.msra.mxu0 %v2221
        %2288 = vmatprep.subr.mxu0 0.0
        %2289 = vmatpush1.xpose.msra.mxu0 %v2224
        %2290 = vmatprep.mubr.f32.mxu0 0.0
        %2291 = vmatmul.mubr.f32.gmra.mrb[0].mxu0 %v2125
        %v2292 = vpop.f32.mrb[0].mxu0
        %v2293 = vadd.f32 %v2117, %v2292
        %v2294 = vpop.f32.mrb[0].mxu0
        %v2295 = vadd.f32 %v2117, %v2294
        %2296 = vmatprep.mubr.f32.mxu0 0.0
        %2297 = vmatmul.mubr.f32.gmra.mrb[0].mxu0 %v2128
        %v2298 = vpop.f32.mrb[0].mxu0
        %v2299 = vadd.f32 %v2122, %v2298
        %v2300 = vpop.f32.mrb[0].mxu0
        %v2301 = vadd.f32 %v2122, %v2300
        %2302 = vdwg.mxu0
        %2303 = vst [vmem:[%s190] sm:$0xff] %v2293
        %2304 = vst [vmem:[%s190 + $0x8] sm:$0xff] %v2295
        %2305 = vst [vmem:[%s190 + $0x10] sm:$0xff] %v2299
        %2306 = vst [vmem:[%s190 + $0x18] sm:$0xff] %v2301
        %s2307 = sand.u32 %s115, 1
        %s2308 = scalar_lea.sflag [#allocation4], %s2307
        %s2309 = sand.u32 %s115, 1
        %s2310 = smul.addr %s2309, 32
        %s2311 = scalar_lea.vmem [#allocation3], %s2310
        // Predicated region
        $region37: #{tpu_custom_call.1} parent=35 // pred_check
          %p2312 = pneg %p125
        $region38: #{tpu_custom_call.1} parent=35 // pred_check_branch
          %2314 = sbr.rel (%p2312) target = $region40
        $region39: #{tpu_custom_call.1} parent=35 // pred_region
          %s2316 = ssub.s32 512, 512
          %2317 = vsyncadd %s2308, %s2316
          %s2318 = smul.addr %s18, 4
          %s2319 = smul.addr %s2318, 128
          %s2320 = scalar_lea.hbm %s4, %s2319
          %s2321 = sshll.u32 %s2311, 4
          %s2322 = int_to_ptr.vmem [resolvable:$true] %s2321
          %2327 = dma.vmem_to_hbm [thread:$0]  %s2322, 512, %s2320, %s2308, 256, 256, 16
        $region40: #{tpu_custom_call.1} parent=35 // pred_fallthru
          _
      $region36: #{tpu_custom_call.1} parent=5 // pred_fallthru
        _
      %p2328 = scmp.le.s32.totalorder 2, %s13
      // Predicated region
      $region41: #{tpu_custom_call.1} parent=5 // pred_check
        %p2329 = pneg %p2328
      $region42: #{tpu_custom_call.1} parent=5 // pred_check_branch
        %2331 = sbr.rel (%p2329) target = $region44
      $region43: #{tpu_custom_call.1} parent=5 // pred_region
        %s2332 = ssub.s32 %s13, 2
        // Predicated region
        $region45: #{tpu_custom_call.1} parent=43 // pred_check
          %p2333 = pneg %p131
        $region46: #{tpu_custom_call.1} parent=43 // pred_check_branch
          %2335 = sbr.rel (%p2333) target = $region48
        $region47: #{tpu_custom_call.1} parent=43 // pred_region
          %s2336 = sand.u32 %s116, 1
          %s2337 = scalar_lea.sflag [#allocation4], %s2336
          %s2338 = sand.u32 %s116, 1
          %s2339 = smul.addr %s2338, 32
          %s2340 = scalar_lea.vmem [#allocation3], %s2339
          %2341 = dma.done %s2337, 512
        $region48: #{tpu_custom_call.1} parent=43 // pred_fallthru
          _
      $region44: #{tpu_custom_call.1} parent=5 // pred_fallthru
        _
    $region6: #{tpu_custom_call.1} parent=1 // loop_footer
      %s17 = sadd.s32 1, %s13
    $region7: #{tpu_custom_call.1} parent=1 // loop_footer_branch
      %12 = sbr.rel target = $region3
    $region8: #{tpu_custom_call.1} parent=1 // loop_exit
      _
    %2342 = vsyncpa [#allocation4], 1
    %s2343 = scalar_lea.sflag [#allocation4], 1
    %2344 = vsyncpa %s2343, 1

</llo_original>
